<compile_context>
chip_gen: v6e
topology: v6e:2x2x1
jax: 0.10.0
libtpu: 0.0.40
codegen_flags: <defaults>
</compile_context>

<pallas_src>
import jax
import jax.numpy as jnp
from jax.experimental import pallas as pl
from jax.experimental.pallas import tpu as pltpu

H = 128  # padded hidden width (all trunk dims 32/64/128/32/8 fit in one MXU pass)


def csv_kernel(x_ref, w1_ref, ws_ref, bs_ref, out_ref):
    f32 = jnp.float32
    bf16 = jnp.bfloat16

    # Layer 1: x [tb, Fp] bf16 @ w1 [Fp, H] bf16 -> f32, bias/ReLU in f32.
    h = jnp.dot(x_ref[...], w1_ref[...], preferred_element_type=f32)
    h = jnp.maximum(h + bs_ref[0], 0.0).astype(bf16)

    # Trunk layers 2..5 and fused head layer 1 (slab slots 0..4), all + ReLU.
    # Zero-padded weight rows/cols + zero-padded biases keep padded lanes exactly 0.
    for l in range(5):
        h = jnp.dot(h, ws_ref[l], preferred_element_type=f32)
        h = jnp.maximum(h + bs_ref[l + 1], 0.0).astype(bf16)

    # Fused head layer 2 (slot 5): block_diag(wr2, wc2) -> [tb, H] logits.
    # Column 0 = regression, columns 1..C = classification, rest = padding.
    z = jnp.dot(h, ws_ref[5], preferred_element_type=f32) + bs_ref[6]

    # Full-width epilogue: identity on column 0, sigmoid everywhere else (padded
    # lanes become sigmoid(0)=0.5 and are sliced off in the wrapper).
    col = jax.lax.broadcasted_iota(jnp.int32, z.shape, 1)
    out_ref[...] = jnp.where(col == 0, z, jax.nn.sigmoid(z)).astype(out_ref.dtype)


def pack_params(params, in_features, classify_sum):
    """Pack the 18 CSVModule tensors into 3 TPU-friendly arrays."""
    f32 = jnp.float32
    C = classify_sum
    assert 1 + C <= H, "classify_sum must fit in the 128-lane output slab"
    Fp = ((in_features + H - 1) // H) * H  # pad input features up to 128-lane multiple

    def pad_to(w, rows, cols):
        r, c = w.shape
        return jnp.pad(w, ((0, rows - r), (0, cols - c)))

    # First-layer weight kept separate so arbitrary in_features (Fp lanes) work.
    w1 = pad_to(params["w1"], Fp, H).astype(jnp.bfloat16)

    # Fused head weights/biases.
    wh1 = jnp.concatenate([params["wr1"], params["wc1"]], axis=1)      # (8, 8)
    bh1 = jnp.concatenate([params["br1"], params["bc1"]], axis=1)      # (1, 8)
    wh2 = jnp.zeros((8, 1 + C), f32)
    wh2 = wh2.at[0:4, 0:1].set(params["wr2"])
    wh2 = wh2.at[4:8, 1:1 + C].set(params["wc2"])                      # (8, 1+C)
    bh2 = jnp.concatenate([params["br2"], params["bc2"]], axis=1)      # (1, 1+C)

    slab_ws = [params["w2"], params["w3"], params["w4"], params["w5"], wh1, wh2]
    w_slab = jnp.stack([pad_to(w, H, H) for w in slab_ws]).astype(jnp.bfloat16)

    biases = [params["b1"], params["b2"], params["b3"], params["b4"],
              params["b5"], bh1, bh2]
    b_slab = jnp.stack([pad_to(b, 1, H) for b in biases]).astype(f32)  # (7, 1, H)

    return {"w1": w1, "w_slab": w_slab, "b_slab": b_slab, "classify_sum": C}


def csv_module_forward(x, packed, *, max_tile_b=2048):
    """x: [B, in_features] float32. Returns (y_regression [B,1], y_classify [B,C])."""
    B, F = x.shape
    C = packed["classify_sum"]
    Fp = packed["w1"].shape[0]

    def round_up(a, m):
        return ((a + m - 1) // m) * m

    # Batch tile: multiple of 16 (bf16 sublane packing), as large as max_tile_b,
    # but capped at ceil(B/2) so the grid has >=2 "parallel" steps whenever the
    # batch allows it (v7x megacore sharding; no effect on single-TC v5e/v6e).
    max_tile_b = max(16, (max_tile_b // 16) * 16)
    b16 = round_up(B, 16)
    half = round_up(max(16, (b16 + 1) // 2), 16)
    tile_b = min(max_tile_b, half)
    Bp = round_up(B, tile_b)

    # Dense 128-lane input DMA: cast to bf16 and zero-pad batch + feature lanes.
    xb = jnp.pad(x.astype(jnp.bfloat16), ((0, Bp - B), (0, Fp - F)))

    grid_spec = pltpu.PrefetchScalarGridSpec(
        num_scalar_prefetch=0,
        grid=(Bp // tile_b,),
        in_specs=[
            pl.BlockSpec((tile_b, Fp), lambda i: (i, 0)),
            pl.BlockSpec(packed["w1"].shape, lambda i: (0, 0)),
            pl.BlockSpec(packed["w_slab"].shape, lambda i: (0, 0, 0)),
            pl.BlockSpec(packed["b_slab"].shape, lambda i: (0, 0, 0)),
        ],
        # Lane-dense output: full 128-lane f32 slab, sliced to (1, C) in the wrapper.
        out_specs=pl.BlockSpec((tile_b, H), lambda i: (i, 0)),
    )

    out = pl.pallas_call(
        csv_kernel,
        out_shape=jax.ShapeDtypeStruct((Bp, H), jnp.float32),
        grid_spec=grid_spec,
        compiler_params=pltpu.CompilerParams(dimension_semantics=("parallel",)),
    )(xb, packed["w1"], packed["w_slab"], packed["b_slab"])

    out = out[:B]
    return out[:, 0:1], out[:, 1:1 + C]


def init_params(key, in_features, classify_sum=2):
    """Deterministic synthetic parameters (shapes match CSVModule.__init__);
    weights stored as (in, out) = transpose of nn.Linear, biases as (1, out)."""
    dims_trunk = [(in_features, 32), (32, 64), (64, 128), (128, 32), (32, 8)]
    dims_reg = [(8, 4), (4, 1)]
    dims_cls = [(8, 4), (4, classify_sum)]

    params = {}
    keys = jax.random.split(key, len(dims_trunk) + len(dims_reg) + len(dims_cls))
    k_iter = iter(keys)

    def make(name_w, name_b, din, dout):
        k = next(k_iter)
        scale = 1.0 / jnp.sqrt(jnp.float32(din))
        params[name_w] = jax.random.uniform(k, (din, dout), jnp.float32, -scale, scale)
        params[name_b] = jnp.zeros((1, dout), jnp.float32)

    for idx, (din, dout) in enumerate(dims_trunk, start=1):
        make(f"w{idx}", f"b{idx}", din, dout)
    make("wr1", "br1", *dims_reg[0])
    make("wr2", "br2", *dims_reg[1])
    make("wc1", "bc1", *dims_cls[0])
    make("wc2", "bc2", *dims_cls[1])
    return params


def reference_forward_bf16(x, p):
    """Pure-JAX reference with the same bf16-input / f32-accumulate matmuls."""
    def dot(a, b):
        return jax.lax.dot(a.astype(jnp.bfloat16), b.astype(jnp.bfloat16),
                           preferred_element_type=jnp.float32)

    h = x
    for i in range(1, 6):
        h = jnp.maximum(dot(h, p[f"w{i}"]) + p[f"b{i}"], 0.0)
    r = dot(jnp.maximum(dot(h, p["wr1"]) + p["br1"], 0.0), p["wr2"]) + p["br2"]
    c = dot(jnp.maximum(dot(h, p["wc1"]) + p["bc1"], 0.0), p["wc2"]) + p["bc2"]
    return r, jax.nn.sigmoid(c)


if __name__ == "__main__":
    key = jax.random.PRNGKey(0)
    k_param, k_x = jax.random.split(key)

    in_features = 16
    classify_sum = 2
    batch = 200  # deliberately not a tile multiple: exercises padding + 2-step grid

    params = init_params(k_param, in_features, classify_sum)
    x = jax.random.normal(k_x, (batch, in_features), jnp.float32)

    packed = pack_params(params, in_features, classify_sum)
    yr, yc = csv_module_forward(x, packed)
    yr = jax.block_until_ready(yr)
    yc = jax.block_until_ready(yc)

    yr_ref, yc_ref = reference_forward_bf16(x, params)
    assert yr.shape == (batch, 1) and yc.shape == (batch, classify_sum)
    # bf16-matmul / f32-accumulate reference (kernel uses bf16 MXU inputs by design).
    assert jnp.allclose(yr, yr_ref, atol=2e-3, rtol=2e-3)
    assert jnp.allclose(yc, yc_ref, atol=2e-3, rtol=2e-3)

    print("KERNEL_OK")
</pallas_src>

<mosaic_0001>
module attributes {stable_mosaic.version = 11 : i64} {
  func.func @csv_kernel(%arg0: i32, %arg1: memref<112x128xbf16, #tpu.memory_space<vmem>>, %arg2: memref<128x128xbf16, #tpu.memory_space<vmem>>, %arg3: memref<6x128x128xbf16, #tpu.memory_space<vmem>>, %arg4: memref<7x1x128xf32, #tpu.memory_space<vmem>>, %arg5: memref<112x128xf32, #tpu.memory_space<vmem>>) attributes {dimension_semantics = [#tpu.dimension_semantics<parallel>], iteration_bounds = array<i64: 2>, scalar_prefetch = 0 : i64, scratch_operands = 0 : i64, tpu.core_type = #tpu.core_type<tc>, window_params = [{transform_indices = @transform_0, window_bounds = array<i64: 112, 128>}, {pipeline_mode = #tpu.pipeline_mode<synchronous>, transform_indices = @transform_1, window_bounds = array<i64: 128, 128>}, {pipeline_mode = #tpu.pipeline_mode<synchronous>, transform_indices = @transform_2, window_bounds = array<i64: 6, 128, 128>}, {pipeline_mode = #tpu.pipeline_mode<synchronous>, transform_indices = @transform_3, window_bounds = array<i64: 7, 1, 128>}, {transform_indices = @transform_4, window_bounds = array<i64: 112, 128>}]} {
    %c0 = arith.constant 0 : index
    %c0_0 = arith.constant 0 : index
    %0 = vector.load %arg1[%c0, %c0_0] : memref<112x128xbf16, #tpu.memory_space<vmem>>, vector<112x128xbf16>
    %c0_1 = arith.constant 0 : index
    %c0_2 = arith.constant 0 : index
    %1 = vector.load %arg2[%c0_1, %c0_2] : memref<128x128xbf16, #tpu.memory_space<vmem>>, vector<128x128xbf16>
    %cst = arith.constant dense<0.000000e+00> : vector<112x128xf32>
    %2 = tpu.matmul %0, %1, %cst {dimension_numbers = #tpu.dot_dimension_numbers<[1], [0], [0], [1], [0, 0, 1, 1], [], []>} : vector<112x128xbf16>, vector<128x128xbf16>, vector<112x128xf32> -> vector<112x128xf32>
    %c0_3 = arith.constant 0 : index
    %c0_4 = arith.constant 0 : index
    %c0_5 = arith.constant 0 : index
    %3 = vector.load %arg4[%c0_3, %c0_4, %c0_5] : memref<7x1x128xf32, #tpu.memory_space<vmem>>, vector<1x1x128xf32>
    %4 = vector.shape_cast %3 : vector<1x1x128xf32> to vector<1x128xf32>
    %5 = vector.broadcast %4 : vector<1x128xf32> to vector<112x128xf32>
    %6 = arith.addf %2, %5 : vector<112x128xf32>
    %cst_6 = arith.constant 0.000000e+00 : f32
    %7 = vector.broadcast %cst_6 : f32 to vector<112x128xf32>
    %8 = arith.maximumf %6, %7 : vector<112x128xf32>
    %9 = arith.truncf %8 : vector<112x128xf32> to vector<112x128xbf16>
    %c0_7 = arith.constant 0 : index
    %c0_8 = arith.constant 0 : index
    %c0_9 = arith.constant 0 : index
    %10 = vector.load %arg3[%c0_7, %c0_8, %c0_9] : memref<6x128x128xbf16, #tpu.memory_space<vmem>>, vector<1x128x128xbf16>
    %11 = vector.shape_cast %10 : vector<1x128x128xbf16> to vector<128x128xbf16>
    %cst_10 = arith.constant dense<0.000000e+00> : vector<112x128xf32>
    %12 = tpu.matmul %9, %11, %cst_10 {dimension_numbers = #tpu.dot_dimension_numbers<[1], [0], [0], [1], [0, 0, 1, 1], [], []>} : vector<112x128xbf16>, vector<128x128xbf16>, vector<112x128xf32> -> vector<112x128xf32>
    %c1 = arith.constant 1 : index
    %c0_11 = arith.constant 0 : index
    %c0_12 = arith.constant 0 : index
    %13 = vector.load %arg4[%c1, %c0_11, %c0_12] : memref<7x1x128xf32, #tpu.memory_space<vmem>>, vector<1x1x128xf32>
    %14 = vector.shape_cast %13 : vector<1x1x128xf32> to vector<1x128xf32>
    %15 = vector.broadcast %14 : vector<1x128xf32> to vector<112x128xf32>
    %16 = arith.addf %12, %15 : vector<112x128xf32>
    %cst_13 = arith.constant 0.000000e+00 : f32
    %17 = vector.broadcast %cst_13 : f32 to vector<112x128xf32>
    %18 = arith.maximumf %16, %17 : vector<112x128xf32>
    %19 = arith.truncf %18 : vector<112x128xf32> to vector<112x128xbf16>
    %c1_14 = arith.constant 1 : index
    %c0_15 = arith.constant 0 : index
    %c0_16 = arith.constant 0 : index
    %20 = vector.load %arg3[%c1_14, %c0_15, %c0_16] : memref<6x128x128xbf16, #tpu.memory_space<vmem>>, vector<1x128x128xbf16>
    %21 = vector.shape_cast %20 : vector<1x128x128xbf16> to vector<128x128xbf16>
    %cst_17 = arith.constant dense<0.000000e+00> : vector<112x128xf32>
    %22 = tpu.matmul %19, %21, %cst_17 {dimension_numbers = #tpu.dot_dimension_numbers<[1], [0], [0], [1], [0, 0, 1, 1], [], []>} : vector<112x128xbf16>, vector<128x128xbf16>, vector<112x128xf32> -> vector<112x128xf32>
    %c2 = arith.constant 2 : index
    %c0_18 = arith.constant 0 : index
    %c0_19 = arith.constant 0 : index
    %23 = vector.load %arg4[%c2, %c0_18, %c0_19] : memref<7x1x128xf32, #tpu.memory_space<vmem>>, vector<1x1x128xf32>
    %24 = vector.shape_cast %23 : vector<1x1x128xf32> to vector<1x128xf32>
    %25 = vector.broadcast %24 : vector<1x128xf32> to vector<112x128xf32>
    %26 = arith.addf %22, %25 : vector<112x128xf32>
    %cst_20 = arith.constant 0.000000e+00 : f32
    %27 = vector.broadcast %cst_20 : f32 to vector<112x128xf32>
    %28 = arith.maximumf %26, %27 : vector<112x128xf32>
    %29 = arith.truncf %28 : vector<112x128xf32> to vector<112x128xbf16>
    %c2_21 = arith.constant 2 : index
    %c0_22 = arith.constant 0 : index
    %c0_23 = arith.constant 0 : index
    %30 = vector.load %arg3[%c2_21, %c0_22, %c0_23] : memref<6x128x128xbf16, #tpu.memory_space<vmem>>, vector<1x128x128xbf16>
    %31 = vector.shape_cast %30 : vector<1x128x128xbf16> to vector<128x128xbf16>
    %cst_24 = arith.constant dense<0.000000e+00> : vector<112x128xf32>
    %32 = tpu.matmul %29, %31, %cst_24 {dimension_numbers = #tpu.dot_dimension_numbers<[1], [0], [0], [1], [0, 0, 1, 1], [], []>} : vector<112x128xbf16>, vector<128x128xbf16>, vector<112x128xf32> -> vector<112x128xf32>
    %c3 = arith.constant 3 : index
    %c0_25 = arith.constant 0 : index
    %c0_26 = arith.constant 0 : index
    %33 = vector.load %arg4[%c3, %c0_25, %c0_26] : memref<7x1x128xf32, #tpu.memory_space<vmem>>, vector<1x1x128xf32>
    %34 = vector.shape_cast %33 : vector<1x1x128xf32> to vector<1x128xf32>
    %35 = vector.broadcast %34 : vector<1x128xf32> to vector<112x128xf32>
    %36 = arith.addf %32, %35 : vector<112x128xf32>
    %cst_27 = arith.constant 0.000000e+00 : f32
    %37 = vector.broadcast %cst_27 : f32 to vector<112x128xf32>
    %38 = arith.maximumf %36, %37 : vector<112x128xf32>
    %39 = arith.truncf %38 : vector<112x128xf32> to vector<112x128xbf16>
    %c3_28 = arith.constant 3 : index
    %c0_29 = arith.constant 0 : index
    %c0_30 = arith.constant 0 : index
    %40 = vector.load %arg3[%c3_28, %c0_29, %c0_30] : memref<6x128x128xbf16, #tpu.memory_space<vmem>>, vector<1x128x128xbf16>
    %41 = vector.shape_cast %40 : vector<1x128x128xbf16> to vector<128x128xbf16>
    %cst_31 = arith.constant dense<0.000000e+00> : vector<112x128xf32>
    %42 = tpu.matmul %39, %41, %cst_31 {dimension_numbers = #tpu.dot_dimension_numbers<[1], [0], [0], [1], [0, 0, 1, 1], [], []>} : vector<112x128xbf16>, vector<128x128xbf16>, vector<112x128xf32> -> vector<112x128xf32>
    %c4 = arith.constant 4 : index
    %c0_32 = arith.constant 0 : index
    %c0_33 = arith.constant 0 : index
    %43 = vector.load %arg4[%c4, %c0_32, %c0_33] : memref<7x1x128xf32, #tpu.memory_space<vmem>>, vector<1x1x128xf32>
    %44 = vector.shape_cast %43 : vector<1x1x128xf32> to vector<1x128xf32>
    %45 = vector.broadcast %44 : vector<1x128xf32> to vector<112x128xf32>
    %46 = arith.addf %42, %45 : vector<112x128xf32>
    %cst_34 = arith.constant 0.000000e+00 : f32
    %47 = vector.broadcast %cst_34 : f32 to vector<112x128xf32>
    %48 = arith.maximumf %46, %47 : vector<112x128xf32>
    %49 = arith.truncf %48 : vector<112x128xf32> to vector<112x128xbf16>
    %c4_35 = arith.constant 4 : index
    %c0_36 = arith.constant 0 : index
    %c0_37 = arith.constant 0 : index
    %50 = vector.load %arg3[%c4_35, %c0_36, %c0_37] : memref<6x128x128xbf16, #tpu.memory_space<vmem>>, vector<1x128x128xbf16>
    %51 = vector.shape_cast %50 : vector<1x128x128xbf16> to vector<128x128xbf16>
    %cst_38 = arith.constant dense<0.000000e+00> : vector<112x128xf32>
    %52 = tpu.matmul %49, %51, %cst_38 {dimension_numbers = #tpu.dot_dimension_numbers<[1], [0], [0], [1], [0, 0, 1, 1], [], []>} : vector<112x128xbf16>, vector<128x128xbf16>, vector<112x128xf32> -> vector<112x128xf32>
    %c5 = arith.constant 5 : index
    %c0_39 = arith.constant 0 : index
    %c0_40 = arith.constant 0 : index
    %53 = vector.load %arg4[%c5, %c0_39, %c0_40] : memref<7x1x128xf32, #tpu.memory_space<vmem>>, vector<1x1x128xf32>
    %54 = vector.shape_cast %53 : vector<1x1x128xf32> to vector<1x128xf32>
    %55 = vector.broadcast %54 : vector<1x128xf32> to vector<112x128xf32>
    %56 = arith.addf %52, %55 : vector<112x128xf32>
    %cst_41 = arith.constant 0.000000e+00 : f32
    %57 = vector.broadcast %cst_41 : f32 to vector<112x128xf32>
    %58 = arith.maximumf %56, %57 : vector<112x128xf32>
    %59 = arith.truncf %58 : vector<112x128xf32> to vector<112x128xbf16>
    %c5_42 = arith.constant 5 : index
    %c0_43 = arith.constant 0 : index
    %c0_44 = arith.constant 0 : index
    %60 = vector.load %arg3[%c5_42, %c0_43, %c0_44] : memref<6x128x128xbf16, #tpu.memory_space<vmem>>, vector<1x128x128xbf16>
    %61 = vector.shape_cast %60 : vector<1x128x128xbf16> to vector<128x128xbf16>
    %cst_45 = arith.constant dense<0.000000e+00> : vector<112x128xf32>
    %62 = tpu.matmul %59, %61, %cst_45 {dimension_numbers = #tpu.dot_dimension_numbers<[1], [0], [0], [1], [0, 0, 1, 1], [], []>} : vector<112x128xbf16>, vector<128x128xbf16>, vector<112x128xf32> -> vector<112x128xf32>
    %c6 = arith.constant 6 : index
    %c0_46 = arith.constant 0 : index
    %c0_47 = arith.constant 0 : index
    %63 = vector.load %arg4[%c6, %c0_46, %c0_47] : memref<7x1x128xf32, #tpu.memory_space<vmem>>, vector<1x1x128xf32>
    %64 = vector.shape_cast %63 : vector<1x1x128xf32> to vector<1x128xf32>
    %65 = vector.broadcast %64 : vector<1x128xf32> to vector<112x128xf32>
    %66 = arith.addf %62, %65 : vector<112x128xf32>
    %67 = tpu.iota {dimensions = array<i32: 1>} : vector<112x128xi32>
    %c0_i32 = arith.constant 0 : i32
    %68 = vector.broadcast %c0_i32 : i32 to vector<112x128xi32>
    %69 = arith.cmpi eq, %67, %68 : vector<112x128xi32>
    %70 = arith.negf %66 : vector<112x128xf32>
    %71 = math.exp %70 : vector<112x128xf32>
    %cst_48 = arith.constant 1.000000e+00 : f32
    %72 = vector.broadcast %cst_48 : f32 to vector<112x128xf32>
    %73 = arith.addf %72, %71 : vector<112x128xf32>
    %74 = arith.divf %72, %73 : vector<112x128xf32>
    %75 = arith.select %69, %66, %74 : vector<112x128xi1>, vector<112x128xf32>
    %c0_49 = arith.constant 0 : index
    %c0_50 = arith.constant 0 : index
    %76 = vector.load %arg5[%c0_49, %c0_50] : memref<112x128xf32, #tpu.memory_space<vmem>>, vector<112x128xf32>
    tpu.vector_store %arg5[%c0_49, %c0_50], %75 {strides = array<i32>} : memref<112x128xf32, #tpu.memory_space<vmem>>, vector<112x128xf32>,
    return
  }
  func.func @transform_0(%arg0: i32) -> (i32, i32) {
    %c0_i32 = arith.constant 0 : i32
    %c0_i32_0 = arith.constant 0 : i32
    return %arg0, %c0_i32 : i32, i32
  }
  func.func @transform_1(%arg0: i32) -> (i32, i32) {
    %c0_i32 = arith.constant 0 : i32
    %c0_i32_0 = arith.constant 0 : i32
    %c0_i32_1 = arith.constant 0 : i32
    return %c0_i32, %c0_i32_0 : i32, i32
  }
  func.func @transform_2(%arg0: i32) -> (i32, i32, i32) {
    %c0_i32 = arith.constant 0 : i32
    %c0_i32_0 = arith.constant 0 : i32
    %c0_i32_1 = arith.constant 0 : i32
    %c0_i32_2 = arith.constant 0 : i32
    return %c0_i32, %c0_i32_0, %c0_i32_1 : i32, i32, i32
  }
  func.func @transform_3(%arg0: i32) -> (i32, i32, i32) {
    %c0_i32 = arith.constant 0 : i32
    %c0_i32_0 = arith.constant 0 : i32
    %c0_i32_1 = arith.constant 0 : i32
    %c0_i32_2 = arith.constant 0 : i32
    return %c0_i32, %c0_i32_0, %c0_i32_1 : i32, i32, i32
  }
  func.func @transform_4(%arg0: i32) -> (i32, i32) {
    %c0_i32 = arith.constant 0 : i32
    %c0_i32_0 = arith.constant 0 : i32
    return %arg0, %c0_i32 : i32, i32
  }
}

</mosaic_0001>

<llo_original>
// kernel: tpu_custom_call.1
$region0: #{tpu_custom_call.1}
  #allocation0 [shape = 'u32[]', space=smem, size = 0x4, offset = 0x4, fixed_abs, tag = 'smem constant byte address 0x4 - core index']
  #allocation1 [shape = 'u32[144,128]{1,0:T(1,128)}', space=vmem, size = 0x12000, scoped, tag = 'internal scratch']
  %s0 = inlined_call_operand.hbm [shape: bf16[224,128], index: 0, kind: input, shape index: {}]
  %s1 = inlined_call_operand.hbm [shape: bf16[128,128], index: 1, kind: input, shape index: {}]
  %s2 = inlined_call_operand.hbm [shape: bf16[6,128,128], index: 2, kind: input, shape index: {}]
  %s3 = inlined_call_operand.hbm [shape: f32[7,1,128], index: 3, kind: input, shape index: {}]
  %s4 = inlined_call_operand.hbm [shape: f32[224,128], index: 4, kind: output, shape index: {}]
  %s5 = sld [smem:[#allocation0]]
  $region65: #{tpu_custom_call.1} parent=0
    _
  %s7 = ssub.s32 1, %s5
  %s8 = scalar_select 0, %s7, %s5
  $region1: #{tpu_custom_call.1} parent=0
    #allocation2 [shape = 'u8[57344]{0}', space=vmem, size = 0xe000, scoped, tag = 'input window, operand 0']
    #allocation3 [shape = 's32[2]{0}', space=sflag, size = 0x8, scoped, tag = 'scoped memory for tpu_custom_call.1']
    #allocation4 [shape = 's32[2]{0}', space=sflag, size = 0x8, scoped, tag = 'scoped memory for tpu_custom_call.1']
    #allocation5 [shape = 'u8[32768]{0}', space=vmem, size = 0x8000, scoped, tag = 'input window, operand 1, single buffered']
    #allocation6 [shape = 's32[1]{0}', space=sflag, size = 0x4, scoped, tag = 'scoped memory for tpu_custom_call.1']
    #allocation7 [shape = 'u8[196608]{0}', space=vmem, size = 0x30000, scoped, tag = 'input window, operand 2, single buffered']
    #allocation8 [shape = 'u8[3584]{0}', space=vmem, size = 0x1000, scoped, tag = 'input window, operand 3, single buffered']
    #allocation9 [shape = 's32[1]{0}', space=sflag, size = 0x4, scoped, tag = 'scoped memory for tpu_custom_call.1']
    #allocation10 [shape = 'u8[114688]{0}', space=vmem, size = 0x1c000, scoped, tag = 'output window, operand 0']
    %9 = vsyncpa [#allocation3], 0
    %s10 = scalar_lea.sflag [#allocation3], 1
    %11 = vsyncpa %s10, 0
    %12 = vsyncpa [#allocation6], 0
    %13 = vsyncpa [#allocation9], 0
    %14 = vsyncpa [#allocation4], 0
    %s15 = scalar_lea.sflag [#allocation4], 1
    %16 = vsyncpa %s15, 0
    loop: start=0, step=1, limit=4
    $region2: #{tpu_custom_call.1} parent=1 // loop_pre_header
      _
    $region3: #{tpu_custom_call.1} parent=1 // loop_header
      %s18 = sphi 0, %s22
      %p19 = scmp.ge.s32.totalorder %s18, 4
      %s28 = sphi 0, %s30
      %s31 = sphi 0, %s28
      %s32 = sphi 0, %s31
      %s48 = sphi 0, %s32
      %s52 = sphi 0, %s52
      %s54 = sphi 0, %s52
      %s55 = sphi 0, %s54
      %s69 = sphi 0, %s55
      %s73 = sphi 0, %s73
      %s75 = sphi 0, %s73
      %s76 = sphi 0, %s75
      %s90 = sphi 0, %s76
      %s94 = sphi 0, %s94
      %s96 = sphi 0, %s94
      %s97 = sphi 0, %s96
      %s111 = sphi 0, %s97
      %s117 = sphi 0, %s119
      %s120 = sphi 0, %s117
      %s121 = sphi 0, %s120
      %s137 = sphi 0, %s121
    $region4: #{tpu_custom_call.1} parent=1 // loop_header_branch
      %21 = sbr.rel (%p19) target = $region8
    $region5: #{tpu_custom_call.1} parent=1 // loop_body
      %s23 = ssub.s32 %s18, 1
      %s24 = ssub.s32 %s18, 2
      %s25 = sadd.s32 %s18, 1
      %s26 = ssub.s32 %s18, %s25
      %p27 = scmp.eq.s32.totalorder %s26, 0
      %s29 = sadd.s32 %s28, 1
      %s30 = scalar_select %p27, %s28, %s29
      %p33 = pneg %p27
      %p34 = scmp.eq.s32.totalorder %s18, 1
      %p35 = por %p33, %p34
      %p36 = scmp.ne.s32.totalorder %s28, %s31
      %p37 = scmp.eq.s32.totalorder %s18, 0
      %p38 = por %p36, %p37
      %p39 = scmp.ne.s32.totalorder %s28, %s31
      %p40 = scmp.eq.s32.totalorder %s23, 1
      %p41 = por %p39, %p40
      %p42 = scmp.ne.s32.totalorder %s31, %s32
      %p43 = scmp.eq.s32.totalorder %s23, 0
      %p44 = por %p42, %p43
      %p45 = scmp.ne.s32.totalorder %s31, %s32
      %p46 = scmp.eq.s32.totalorder %s24, 1
      %p47 = por %p45, %p46
      %p49 = scmp.ne.s32.totalorder %s32, %s48
      %p50 = scmp.eq.s32.totalorder %s24, 0
      %p51 = por %p49, %p50
      %s53 = sadd.s32 %s52, 1
      %p56 = scmp.eq.s32.totalorder %s18, 1
      %p57 = scmp.ne.s32.totalorder %s52, %s54
      %p58 = scmp.eq.s32.totalorder %s18, 0
      %p59 = por %p57, %p58
      %p60 = scmp.ne.s32.totalorder %s52, %s54
      %p61 = scmp.eq.s32.totalorder %s23, 1
      %p62 = por %p60, %p61
      %p63 = scmp.ne.s32.totalorder %s54, %s55
      %p64 = scmp.eq.s32.totalorder %s23, 0
      %p65 = por %p63, %p64
      %p66 = scmp.ne.s32.totalorder %s54, %s55
      %p67 = scmp.eq.s32.totalorder %s24, 1
      %p68 = por %p66, %p67
      %p70 = scmp.ne.s32.totalorder %s55, %s69
      %p71 = scmp.eq.s32.totalorder %s24, 0
      %p72 = por %p70, %p71
      %s74 = sadd.s32 %s73, 1
      %p77 = scmp.eq.s32.totalorder %s18, 1
      %p78 = scmp.ne.s32.totalorder %s73, %s75
      %p79 = scmp.eq.s32.totalorder %s18, 0
      %p80 = por %p78, %p79
      %p81 = scmp.ne.s32.totalorder %s73, %s75
      %p82 = scmp.eq.s32.totalorder %s23, 1
      %p83 = por %p81, %p82
      %p84 = scmp.ne.s32.totalorder %s75, %s76
      %p85 = scmp.eq.s32.totalorder %s23, 0
      %p86 = por %p84, %p85
      %p87 = scmp.ne.s32.totalorder %s75, %s76
      %p88 = scmp.eq.s32.totalorder %s24, 1
      %p89 = por %p87, %p88
      %p91 = scmp.ne.s32.totalorder %s76, %s90
      %p92 = scmp.eq.s32.totalorder %s24, 0
      %p93 = por %p91, %p92
      %s95 = sadd.s32 %s94, 1
      %p98 = scmp.eq.s32.totalorder %s18, 1
      %p99 = scmp.ne.s32.totalorder %s94, %s96
      %p100 = scmp.eq.s32.totalorder %s18, 0
      %p101 = por %p99, %p100
      %p102 = scmp.ne.s32.totalorder %s94, %s96
      %p103 = scmp.eq.s32.totalorder %s23, 1
      %p104 = por %p102, %p103
      %p105 = scmp.ne.s32.totalorder %s96, %s97
      %p106 = scmp.eq.s32.totalorder %s23, 0
      %p107 = por %p105, %p106
      %p108 = scmp.ne.s32.totalorder %s96, %s97
      %p109 = scmp.eq.s32.totalorder %s24, 1
      %p110 = por %p108, %p109
      %p112 = scmp.ne.s32.totalorder %s97, %s111
      %p113 = scmp.eq.s32.totalorder %s24, 0
      %p114 = por %p112, %p113
      %s115 = ssub.s32 %s18, %s25
      %p116 = scmp.eq.s32.totalorder %s115, 0
      %s118 = sadd.s32 %s117, 1
      %s119 = scalar_select %p116, %s117, %s118
      %p122 = pneg %p116
      %p123 = scmp.eq.s32.totalorder %s18, 1
      %p124 = por %p122, %p123
      %p125 = scmp.ne.s32.totalorder %s117, %s120
      %p126 = scmp.eq.s32.totalorder %s18, 0
      %p127 = por %p125, %p126
      %p128 = scmp.ne.s32.totalorder %s117, %s120
      %p129 = scmp.eq.s32.totalorder %s23, 1
      %p130 = por %p128, %p129
      %p131 = scmp.ne.s32.totalorder %s120, %s121
      %p132 = scmp.eq.s32.totalorder %s23, 0
      %p133 = por %p131, %p132
      %p134 = scmp.ne.s32.totalorder %s120, %s121
      %p135 = scmp.eq.s32.totalorder %s24, 1
      %p136 = por %p134, %p135
      %p138 = scmp.ne.s32.totalorder %s121, %s137
      %p139 = scmp.eq.s32.totalorder %s24, 0
      %p140 = por %p138, %p139
      %p141 = scmp.le.s32.totalorder 1, %s18
      %p142 = scmp.lt.s32.totalorder %s18, 3
      %p143 = pnand %p141, %p142
      %p144 = pneg %p143
      // Predicated region
      $region9: #{tpu_custom_call.1} parent=5 // pred_check
        _
      $region10: #{tpu_custom_call.1} parent=5 // pred_check_branch
        %146 = sbr.rel (%p143) target = $region12
      $region11: #{tpu_custom_call.1} parent=5 // pred_region
        %s147 = ssub.s32 %s18, 1
        // Predicated region
        $region13: #{tpu_custom_call.1} parent=11 // pred_check
          %p148 = pneg %p65
        $region14: #{tpu_custom_call.1} parent=11 // pred_check_branch
          %150 = sbr.rel (%p148) target = $region16
        $region15: #{tpu_custom_call.1} parent=11 // pred_region
          %s152 = ssub.s32 1024, 1024
          %153 = vsyncadd [#allocation6], %s152
          %s154 = sshll.u32 [#allocation5], 4
          %s155 = int_to_ptr.vmem [resolvable:$true] %s154
          %160 = dma.hbm_to_vmem [thread:$0]  %s1, 1024, %s155, [#allocation6], 64, 64, 4
        $region16: #{tpu_custom_call.1} parent=11 // pred_fallthru
          _
        // Predicated region
        $region17: #{tpu_custom_call.1} parent=11 // pred_check
          %p161 = pneg %p86
        $region18: #{tpu_custom_call.1} parent=11 // pred_check_branch
          %163 = sbr.rel (%p161) target = $region20
        $region19: #{tpu_custom_call.1} parent=11 // pred_region
          %s165 = ssub.s32 6144, 6144
          %166 = vsyncadd [#allocation6], %s165
          %s167 = sshll.u32 [#allocation7], 4
          %s168 = int_to_ptr.vmem [resolvable:$true] %s167
          %173 = dma.hbm_to_vmem [thread:$0]  %s2, 6144, %s168, [#allocation6], 64, 64, 4
        $region20: #{tpu_custom_call.1} parent=11 // pred_fallthru
          _
        // Predicated region
        $region21: #{tpu_custom_call.1} parent=11 // pred_check
          %p174 = pneg %p107
        $region22: #{tpu_custom_call.1} parent=11 // pred_check_branch
          %176 = sbr.rel (%p174) target = $region24
        $region23: #{tpu_custom_call.1} parent=11 // pred_region
          %s178 = ssub.s32 112, 112
          %179 = vsyncadd [#allocation9], %s178
          %s180 = sshll.u32 [#allocation8], 4
          %s181 = int_to_ptr.vmem [resolvable:$true] %s180
          %186 = dma.hbm_to_vmem [thread:$0]  %s3, 112, %s181, [#allocation9], 16, 16, 1
        $region24: #{tpu_custom_call.1} parent=11 // pred_fallthru
          _
      $region12: #{tpu_custom_call.1} parent=5 // pred_fallthru
        _
      %p187 = scmp.lt.s32.totalorder %s18, 2
      // Predicated region
      $region25: #{tpu_custom_call.1} parent=5 // pred_check
        %p188 = pneg %p187
      $region26: #{tpu_custom_call.1} parent=5 // pred_check_branch
        %190 = sbr.rel (%p188) target = $region28
      $region27: #{tpu_custom_call.1} parent=5 // pred_region
        // Predicated region
        $region29: #{tpu_custom_call.1} parent=27 // pred_check
          %p191 = pneg %p38
        $region30: #{tpu_custom_call.1} parent=27 // pred_check_branch
          %193 = sbr.rel (%p191) target = $region32
        $region31: #{tpu_custom_call.1} parent=27 // pred_region
          %s194 = sand.u32 %s28, 1
          %s195 = scalar_lea.sflag [#allocation3], %s194
          %s196 = sand.u32 %s28, 1
          %s197 = smul.addr %s196, 56
          %s198 = scalar_lea.vmem [#allocation2], %s197
          %s199 = smul.u32 14, %s18
          %s201 = ssub.s32 896, 896
          %202 = vsyncadd %s195, %s201
          %s203 = smul.addr %s199, 64
          %s204 = scalar_lea.hbm %s0, %s203
          %s205 = sshll.u32 %s198, 4
          %s206 = int_to_ptr.vmem [resolvable:$true] %s205
          %211 = dma.hbm_to_vmem [thread:$0]  %s204, 896, %s206, %s195, 64, 64, 4
        $region32: #{tpu_custom_call.1} parent=27 // pred_fallthru
          _
      $region28: #{tpu_custom_call.1} parent=5 // pred_fallthru
        _
      %p212 = scmp.le.s32.totalorder 1, %s18
      %p213 = scmp.lt.s32.totalorder %s18, 3
      %p214 = pnand %p212, %p213
      %p215 = pneg %p214
      // Predicated region
      $region33: #{tpu_custom_call.1} parent=5 // pred_check
        _
      $region34: #{tpu_custom_call.1} parent=5 // pred_check_branch
        %217 = sbr.rel (%p214) target = $region36
      $region35: #{tpu_custom_call.1} parent=5 // pred_region
        %s218 = ssub.s32 %s18, 1
        %s219 = sand.u32 %s31, 1
        %s220 = scalar_lea.sflag [#allocation3], %s219
        %s221 = sand.u32 %s31, 1
        %s222 = smul.addr %s221, 56
        %s223 = scalar_lea.vmem [#allocation2], %s222
        // Predicated region
        $region37: #{tpu_custom_call.1} parent=35 // pred_check
          %p224 = pneg %p44
        $region38: #{tpu_custom_call.1} parent=35 // pred_check_branch
          %226 = sbr.rel (%p224) target = $region40
        $region39: #{tpu_custom_call.1} parent=35 // pred_region
          %227 = dma.done %s220, 896
        $region40: #{tpu_custom_call.1} parent=35 // pred_fallthru
          _
        // Predicated region
        $region41: #{tpu_custom_call.1} parent=35 // pred_check
          %p228 = pneg %p65
        $region42: #{tpu_custom_call.1} parent=35 // pred_check_branch
          %230 = sbr.rel (%p228) target = $region44
        $region43: #{tpu_custom_call.1} parent=35 // pred_region
          %231 = dma.done [#allocation6], 1024
        $region44: #{tpu_custom_call.1} parent=35 // pred_fallthru
          _
        // Predicated region
        $region45: #{tpu_custom_call.1} parent=35 // pred_check
          %p232 = pneg %p86
        $region46: #{tpu_custom_call.1} parent=35 // pred_check_branch
          %234 = sbr.rel (%p232) target = $region48
        $region47: #{tpu_custom_call.1} parent=35 // pred_region
          %235 = dma.done [#allocation6], 6144
        $region48: #{tpu_custom_call.1} parent=35 // pred_fallthru
          _
        // Predicated region
        $region49: #{tpu_custom_call.1} parent=35 // pred_check
          %p236 = pneg %p107
        $region50: #{tpu_custom_call.1} parent=35 // pred_check_branch
          %238 = sbr.rel (%p236) target = $region52
        $region51: #{tpu_custom_call.1} parent=35 // pred_region
          %239 = dma.done [#allocation9], 112
        $region52: #{tpu_custom_call.1} parent=35 // pred_fallthru
          _
        %s240 = sand.u32 %s31, 1
        %s241 = scalar_lea.sflag [#allocation3], %s240
        %s242 = sand.u32 %s31, 1
        %s243 = smul.addr %s242, 56
        %s244 = scalar_lea.vmem [#allocation2], %s243
        %p245 = pneg %p44
        %p246 = pneg %p41
        %p247 = pneg %p65
        %p248 = pneg %p62
        %p249 = pneg %p86
        %p250 = pneg %p83
        %p251 = pneg %p107
        %p252 = pneg %p104
        %p253 = pneg %p133
        %p254 = pneg %p130
        %s255 = sand.u32 %s120, 1
        %s256 = scalar_lea.sflag [#allocation4], %s255
        %s257 = sand.u32 %s120, 1
        %s258 = smul.addr %s257, 112
        %s259 = scalar_lea.vmem [#allocation10], %s258
        %s260 = smul.u32 14, %s23
        %s261 = smul.u32 14, %s23
        %v263 = vld [vmem:[%s223] sm:$0xf]
        %v264 = vld [vmem:[%s223 + $0x4] sm:$0xf]
        %v265 = vld [vmem:[%s223 + $0x8] sm:$0xf]
        %v266 = vld [vmem:[%s223 + $0xc] sm:$0xf]
        %v267 = vld [vmem:[%s223 + $0x10] sm:$0xf]
        %v268 = vld [vmem:[%s223 + $0x14] sm:$0xf]
        %v269 = vld [vmem:[%s223 + $0x18] sm:$0xf]
        %v270 = vld [vmem:[%s223 + $0x1c] sm:$0xf]
        %v271 = vld [vmem:[%s223 + $0x20] sm:$0xf]
        %v272 = vld [vmem:[%s223 + $0x24] sm:$0xf]
        %v273 = vld [vmem:[%s223 + $0x28] sm:$0xf]
        %v274 = vld [vmem:[%s223 + $0x2c] sm:$0xf]
        %v275 = vld [vmem:[%s223 + $0x30] sm:$0xf]
        %v276 = vld [vmem:[%s223 + $0x34] sm:$0xf]
        %v277 = vld [vmem:[#allocation5] sm:$0xf]
        %v278 = vld [vmem:[#allocation5 + $0x4] sm:$0xf]
        %v279 = vld [vmem:[#allocation5 + $0x8] sm:$0xf]
        %v280 = vld [vmem:[#allocation5 + $0xc] sm:$0xf]
        %v281 = vld [vmem:[#allocation5 + $0x10] sm:$0xf]
        %v282 = vld [vmem:[#allocation5 + $0x14] sm:$0xf]
        %v283 = vld [vmem:[#allocation5 + $0x18] sm:$0xf]
        %v284 = vld [vmem:[#allocation5 + $0x1c] sm:$0xf]
        %v285 = vld [vmem:[#allocation5 + $0x20] sm:$0xf]
        %v286 = vld [vmem:[#allocation5 + $0x24] sm:$0xf]
        %v287 = vld [vmem:[#allocation5 + $0x28] sm:$0xf]
        %v288 = vld [vmem:[#allocation5 + $0x2c] sm:$0xf]
        %v289 = vld [vmem:[#allocation5 + $0x30] sm:$0xf]
        %v290 = vld [vmem:[#allocation5 + $0x34] sm:$0xf]
        %v291 = vld [vmem:[#allocation5 + $0x38] sm:$0xf]
        %v292 = vld [vmem:[#allocation5 + $0x3c] sm:$0xf]
        %v293 = vld [vmem:[#allocation8] sm:$0x1]
        %v295 = vlaneseq
        %v296 = vshrl.u32 %v295, 7
        %v297 = vsub.s32 0, %v296
        %v298 = vrot.slane %v293, %v297
        %v314 = vunpack.c.l.b16 %v263
        %v315 = vunpack.c.l.b16 %v264
        %v316 = vunpack.c.l.b16 %v265
        %v317 = vunpack.c.l.b16 %v266
        %v318 = vunpack.c.l.b16 %v267
        %v319 = vunpack.c.l.b16 %v268
        %v320 = vunpack.c.l.b16 %v269
        %v321 = vunpack.c.l.b16 %v270
        %v322 = vunpack.c.l.b16 %v271
        %v323 = vunpack.c.l.b16 %v272
        %v324 = vunpack.c.l.b16 %v273
        %v325 = vunpack.c.l.b16 %v274
        %v326 = vunpack.c.l.b16 %v275
        %v327 = vunpack.c.l.b16 %v276
        %v328 = vpack.c.b16 %v315, %v314
        %v329 = vpack.c.b16 %v317, %v316
        %v330 = vpack.c.b16 %v319, %v318
        %v331 = vpack.c.b16 %v321, %v320
        %v332 = vpack.c.b16 %v323, %v322
        %v333 = vpack.c.b16 %v325, %v324
        %v334 = vpack.c.b16 %v327, %v326
        %v358 = vunpack.c.l.b16 %v277
        %v359 = vunpack.c.l.b16 %v278
        %v360 = vunpack.c.l.b16 %v279
        %v361 = vunpack.c.l.b16 %v280
        %v362 = vunpack.c.l.b16 %v281
        %v363 = vunpack.c.l.b16 %v282
        %v364 = vunpack.c.l.b16 %v283
        %v365 = vunpack.c.l.b16 %v284
        %v366 = vunpack.c.l.b16 %v285
        %v367 = vunpack.c.l.b16 %v286
        %v368 = vunpack.c.l.b16 %v287
        %v369 = vunpack.c.l.b16 %v288
        %v370 = vunpack.c.l.b16 %v289
        %v371 = vunpack.c.l.b16 %v290
        %v372 = vunpack.c.l.b16 %v291
        %v373 = vunpack.c.l.b16 %v292
        %v374 = vpack.c.b16 %v359, %v358
        %v375 = vpack.c.b16 %v361, %v360
        %v376 = vpack.c.b16 %v363, %v362
        %v377 = vpack.c.b16 %v365, %v364
        %v378 = vpack.c.b16 %v367, %v366
        %v379 = vpack.c.b16 %v369, %v368
        %v380 = vpack.c.b16 %v371, %v370
        %v381 = vpack.c.b16 %v373, %v372
        %390 = vmatprep.subr.bf16.mxu0 0
        %391 = vmatpush1.bf16.msra.mxu0 %v381
        %392 = vmatprep.subr.bf16.mxu0 0
        %393 = vmatpush1.bf16.msra.mxu0 %v380
        %394 = vmatprep.subr.bf16.mxu0 0
        %395 = vmatpush1.bf16.msra.mxu0 %v379
        %396 = vmatprep.subr.bf16.mxu0 0
        %397 = vmatpush1.bf16.msra.mxu0 %v378
        %398 = vmatprep.subr.bf16.mxu0 0
        %399 = vmatpush1.bf16.msra.mxu0 %v377
        %400 = vmatprep.subr.bf16.mxu0 0
        %401 = vmatpush1.bf16.msra.mxu0 %v376
        %402 = vmatprep.subr.bf16.mxu0 0
        %403 = vmatpush1.bf16.msra.mxu0 %v375
        %404 = vmatprep.subr.bf16.mxu0 0
        %405 = vmatpush1.bf16.msra.mxu0 %v374
        %406 = vmatprep.subr.bf16.mxu0 0
        %407 = vmatpush2.bf16.msra.mxu0 0
        %408 = vmatprep.subr.bf16.mxu0 0
        %409 = vmatpush2.bf16.msra.mxu0 0
        %410 = vmatprep.subr.bf16.mxu0 0
        %411 = vmatpush2.bf16.msra.mxu0 0
        %412 = vmatprep.subr.bf16.mxu0 0
        %413 = vmatpush2.bf16.msra.mxu0 0
        %414 = vmatprep.subr.bf16.mxu0 0
        %415 = vmatpush2.bf16.msra.mxu0 0
        %416 = vmatprep.subr.bf16.mxu0 0
        %417 = vmatpush2.bf16.msra.mxu0 0
        %418 = vmatprep.subr.bf16.mxu0 0
        %419 = vmatpush2.bf16.msra.mxu0 0
        %420 = vmatprep.subr.bf16.mxu0 0
        %421 = vmatpush2.bf16.msra.mxu0 0
        %422 = vmatprep.mubr.bf16.mxu0 0
        %423 = vmatmul.mubr.bf16.gmra.mxu0 %v328
        %v424 = vpop.f32.mrf.mxu0
        %v425 = vadd.f32 %v298, %v424
        %v426 = vpop.f32.mrf.mxu0
        %v427 = vpop.f32.mrf.mxu0
        %v428 = vadd.f32 %v298, %v427
        %v429 = vpop.f32.mrf.mxu0
        %430 = vmatprep.mubr.bf16.mxu0 0
        %431 = vmatmul.mubr.bf16.gmra.mxu0 %v329
        %v432 = vpop.f32.mrf.mxu0
        %v433 = vadd.f32 %v298, %v432
        %v434 = vpop.f32.mrf.mxu0
        %v435 = vpop.f32.mrf.mxu0
        %v436 = vadd.f32 %v298, %v435
        %v437 = vpop.f32.mrf.mxu0
        %438 = vmatprep.mubr.bf16.mxu0 0
        %439 = vmatmul.mubr.bf16.gmra.mxu0 %v330
        %v440 = vpop.f32.mrf.mxu0
        %v441 = vadd.f32 %v298, %v440
        %v442 = vpop.f32.mrf.mxu0
        %v443 = vpop.f32.mrf.mxu0
        %v444 = vadd.f32 %v298, %v443
        %v445 = vpop.f32.mrf.mxu0
        %446 = vmatprep.mubr.bf16.mxu0 0
        %447 = vmatmul.mubr.bf16.gmra.mxu0 %v331
        %v448 = vpop.f32.mrf.mxu0
        %v449 = vadd.f32 %v298, %v448
        %v450 = vpop.f32.mrf.mxu0
        %v451 = vpop.f32.mrf.mxu0
        %v452 = vadd.f32 %v298, %v451
        %v453 = vpop.f32.mrf.mxu0
        %454 = vmatprep.mubr.bf16.mxu0 0
        %455 = vmatmul.mubr.bf16.gmra.mxu0 %v332
        %v456 = vpop.f32.mrf.mxu0
        %v457 = vadd.f32 %v298, %v456
        %v458 = vpop.f32.mrf.mxu0
        %v459 = vpop.f32.mrf.mxu0
        %v460 = vadd.f32 %v298, %v459
        %v461 = vpop.f32.mrf.mxu0
        %462 = vmatprep.mubr.bf16.mxu0 0
        %463 = vmatmul.mubr.bf16.gmra.mxu0 %v333
        %v464 = vpop.f32.mrf.mxu0
        %v465 = vadd.f32 %v298, %v464
        %v466 = vpop.f32.mrf.mxu0
        %v467 = vpop.f32.mrf.mxu0
        %v468 = vadd.f32 %v298, %v467
        %v469 = vpop.f32.mrf.mxu0
        %470 = vmatprep.mubr.bf16.mxu0 0
        %471 = vmatmul.mubr.bf16.gmra.mxu0 %v334
        %v472 = vpop.f32.mrf.mxu0
        %v473 = vadd.f32 %v298, %v472
        %v474 = vpop.f32.mrf.mxu0
        %v475 = vpop.f32.mrf.mxu0
        %v476 = vadd.f32 %v298, %v475
        %v477 = vpop.f32.mrf.mxu0
        %478 = vdwg.mxu0
        %v479 = vmax.f32 %v425, 0.0
        %v480 = vmax.f32 %v428, 0.0
        %v481 = vmax.f32 %v433, 0.0
        %v482 = vmax.f32 %v436, 0.0
        %v483 = vmax.f32 %v441, 0.0
        %v484 = vmax.f32 %v444, 0.0
        %v485 = vmax.f32 %v449, 0.0
        %v486 = vmax.f32 %v452, 0.0
        %v487 = vmax.f32 %v457, 0.0
        %v488 = vmax.f32 %v460, 0.0
        %v489 = vmax.f32 %v465, 0.0
        %v490 = vmax.f32 %v468, 0.0
        %v491 = vmax.f32 %v473, 0.0
        %v492 = vmax.f32 %v476, 0.0
        %v493 = vpack.c.bf16 %v480, %v479
        %v494 = vpack.c.bf16 %v482, %v481
        %v495 = vpack.c.bf16 %v484, %v483
        %v496 = vpack.c.bf16 %v486, %v485
        %v497 = vpack.c.bf16 %v488, %v487
        %v498 = vpack.c.bf16 %v490, %v489
        %v499 = vpack.c.bf16 %v492, %v491
        %v500 = vld [vmem:[#allocation7] sm:$0xf]
        %v501 = vld [vmem:[#allocation7 + $0x4] sm:$0xf]
        %v502 = vld [vmem:[#allocation7 + $0x8] sm:$0xf]
        %v503 = vld [vmem:[#allocation7 + $0xc] sm:$0xf]
        %v504 = vld [vmem:[#allocation7 + $0x10] sm:$0xf]
        %v505 = vld [vmem:[#allocation7 + $0x14] sm:$0xf]
        %v506 = vld [vmem:[#allocation7 + $0x18] sm:$0xf]
        %v507 = vld [vmem:[#allocation7 + $0x1c] sm:$0xf]
        %v508 = vld [vmem:[#allocation7 + $0x20] sm:$0xf]
        %v509 = vld [vmem:[#allocation7 + $0x24] sm:$0xf]
        %v510 = vld [vmem:[#allocation7 + $0x28] sm:$0xf]
        %v511 = vld [vmem:[#allocation7 + $0x2c] sm:$0xf]
        %v512 = vld [vmem:[#allocation7 + $0x30] sm:$0xf]
        %v513 = vld [vmem:[#allocation7 + $0x34] sm:$0xf]
        %v514 = vld [vmem:[#allocation7 + $0x38] sm:$0xf]
        %v515 = vld [vmem:[#allocation7 + $0x3c] sm:$0xf]
        %s516 = scalar_lea.vmem [#allocation8], 1
        %v517 = vld [vmem:[%s516] sm:$0x1]
        %v519 = vlaneseq
        %v520 = vshrl.u32 %v519, 7
        %v521 = vsub.s32 0, %v520
        %v522 = vrot.slane %v517, %v521
        %v540 = vunpack.c.l.b16 %v500
        %v541 = vunpack.c.l.b16 %v501
        %v542 = vunpack.c.l.b16 %v502
        %v543 = vunpack.c.l.b16 %v503
        %v544 = vunpack.c.l.b16 %v504
        %v545 = vunpack.c.l.b16 %v505
        %v546 = vunpack.c.l.b16 %v506
        %v547 = vunpack.c.l.b16 %v507
        %v548 = vunpack.c.l.b16 %v508
        %v549 = vunpack.c.l.b16 %v509
        %v550 = vunpack.c.l.b16 %v510
        %v551 = vunpack.c.l.b16 %v511
        %v552 = vunpack.c.l.b16 %v512
        %v553 = vunpack.c.l.b16 %v513
        %v554 = vunpack.c.l.b16 %v514
        %v555 = vunpack.c.l.b16 %v515
        %v556 = vpack.c.b16 %v541, %v540
        %v557 = vpack.c.b16 %v543, %v542
        %v558 = vpack.c.b16 %v545, %v544
        %v559 = vpack.c.b16 %v547, %v546
        %v560 = vpack.c.b16 %v549, %v548
        %v561 = vpack.c.b16 %v551, %v550
        %v562 = vpack.c.b16 %v553, %v552
        %v563 = vpack.c.b16 %v555, %v554
        %572 = vmatprep.subr.bf16.mxu0 0
        %573 = vmatpush1.bf16.msra.mxu0 %v563
        %574 = vmatprep.subr.bf16.mxu0 0
        %575 = vmatpush1.bf16.msra.mxu0 %v562
        %576 = vmatprep.subr.bf16.mxu0 0
        %577 = vmatpush1.bf16.msra.mxu0 %v561
        %578 = vmatprep.subr.bf16.mxu0 0
        %579 = vmatpush1.bf16.msra.mxu0 %v560
        %580 = vmatprep.subr.bf16.mxu0 0
        %581 = vmatpush1.bf16.msra.mxu0 %v559
        %582 = vmatprep.subr.bf16.mxu0 0
        %583 = vmatpush1.bf16.msra.mxu0 %v558
        %584 = vmatprep.subr.bf16.mxu0 0
        %585 = vmatpush1.bf16.msra.mxu0 %v557
        %586 = vmatprep.subr.bf16.mxu0 0
        %587 = vmatpush1.bf16.msra.mxu0 %v556
        %588 = vmatprep.subr.bf16.mxu0 0
        %589 = vmatpush2.bf16.msra.mxu0 0
        %590 = vmatprep.subr.bf16.mxu0 0
        %591 = vmatpush2.bf16.msra.mxu0 0
        %592 = vmatprep.subr.bf16.mxu0 0
        %593 = vmatpush2.bf16.msra.mxu0 0
        %594 = vmatprep.subr.bf16.mxu0 0
        %595 = vmatpush2.bf16.msra.mxu0 0
        %596 = vmatprep.subr.bf16.mxu0 0
        %597 = vmatpush2.bf16.msra.mxu0 0
        %598 = vmatprep.subr.bf16.mxu0 0
        %599 = vmatpush2.bf16.msra.mxu0 0
        %600 = vmatprep.subr.bf16.mxu0 0
        %601 = vmatpush2.bf16.msra.mxu0 0
        %602 = vmatprep.subr.bf16.mxu0 0
        %603 = vmatpush2.bf16.msra.mxu0 0
        %604 = vmatprep.mubr.bf16.mxu0 0
        %605 = vmatmul.mubr.bf16.gmra.mxu0 %v493
        %v606 = vpop.f32.mrf.mxu0
        %v607 = vadd.f32 %v522, %v606
        %v608 = vpop.f32.mrf.mxu0
        %v609 = vpop.f32.mrf.mxu0
        %v610 = vadd.f32 %v522, %v609
        %v611 = vpop.f32.mrf.mxu0
        %612 = vmatprep.mubr.bf16.mxu0 0
        %613 = vmatmul.mubr.bf16.gmra.mxu0 %v494
        %v614 = vpop.f32.mrf.mxu0
        %v615 = vadd.f32 %v522, %v614
        %v616 = vpop.f32.mrf.mxu0
        %v617 = vpop.f32.mrf.mxu0
        %v618 = vadd.f32 %v522, %v617
        %v619 = vpop.f32.mrf.mxu0
        %620 = vmatprep.mubr.bf16.mxu0 0
        %621 = vmatmul.mubr.bf16.gmra.mxu0 %v495
        %v622 = vpop.f32.mrf.mxu0
        %v623 = vadd.f32 %v522, %v622
        %v624 = vpop.f32.mrf.mxu0
        %v625 = vpop.f32.mrf.mxu0
        %v626 = vadd.f32 %v522, %v625
        %v627 = vpop.f32.mrf.mxu0
        %628 = vmatprep.mubr.bf16.mxu0 0
        %629 = vmatmul.mubr.bf16.gmra.mxu0 %v496
        %v630 = vpop.f32.mrf.mxu0
        %v631 = vadd.f32 %v522, %v630
        %v632 = vpop.f32.mrf.mxu0
        %v633 = vpop.f32.mrf.mxu0
        %v634 = vadd.f32 %v522, %v633
        %v635 = vpop.f32.mrf.mxu0
        %636 = vmatprep.mubr.bf16.mxu0 0
        %637 = vmatmul.mubr.bf16.gmra.mxu0 %v497
        %v638 = vpop.f32.mrf.mxu0
        %v639 = vadd.f32 %v522, %v638
        %v640 = vpop.f32.mrf.mxu0
        %v641 = vpop.f32.mrf.mxu0
        %v642 = vadd.f32 %v522, %v641
        %v643 = vpop.f32.mrf.mxu0
        %644 = vmatprep.mubr.bf16.mxu0 0
        %645 = vmatmul.mubr.bf16.gmra.mxu0 %v498
        %v646 = vpop.f32.mrf.mxu0
        %v647 = vadd.f32 %v522, %v646
        %v648 = vpop.f32.mrf.mxu0
        %v649 = vpop.f32.mrf.mxu0
        %v650 = vadd.f32 %v522, %v649
        %v651 = vpop.f32.mrf.mxu0
        %652 = vmatprep.mubr.bf16.mxu0 0
        %653 = vmatmul.mubr.bf16.gmra.mxu0 %v499
        %v654 = vpop.f32.mrf.mxu0
        %v655 = vadd.f32 %v522, %v654
        %v656 = vpop.f32.mrf.mxu0
        %v657 = vpop.f32.mrf.mxu0
        %v658 = vadd.f32 %v522, %v657
        %v659 = vpop.f32.mrf.mxu0
        %660 = vdwg.mxu0
        %v661 = vmax.f32 %v607, 0.0
        %v662 = vmax.f32 %v610, 0.0
        %v663 = vmax.f32 %v615, 0.0
        %v664 = vmax.f32 %v618, 0.0
        %v665 = vmax.f32 %v623, 0.0
        %v666 = vmax.f32 %v626, 0.0
        %v667 = vmax.f32 %v631, 0.0
        %v668 = vmax.f32 %v634, 0.0
        %v669 = vmax.f32 %v639, 0.0
        %v670 = vmax.f32 %v642, 0.0
        %v671 = vmax.f32 %v647, 0.0
        %v672 = vmax.f32 %v650, 0.0
        %v673 = vmax.f32 %v655, 0.0
        %v674 = vmax.f32 %v658, 0.0
        %v675 = vpack.c.bf16 %v662, %v661
        %v676 = vpack.c.bf16 %v664, %v663
        %v677 = vpack.c.bf16 %v666, %v665
        %v678 = vpack.c.bf16 %v668, %v667
        %v679 = vpack.c.bf16 %v670, %v669
        %v680 = vpack.c.bf16 %v672, %v671
        %v681 = vpack.c.bf16 %v674, %v673
        %s682 = scalar_lea.vmem [#allocation7], 64
        %v683 = vld [vmem:[%s682] sm:$0xf]
        %v684 = vld [vmem:[%s682 + $0x4] sm:$0xf]
        %v685 = vld [vmem:[%s682 + $0x8] sm:$0xf]
        %v686 = vld [vmem:[%s682 + $0xc] sm:$0xf]
        %v687 = vld [vmem:[%s682 + $0x10] sm:$0xf]
        %v688 = vld [vmem:[%s682 + $0x14] sm:$0xf]
        %v689 = vld [vmem:[%s682 + $0x18] sm:$0xf]
        %v690 = vld [vmem:[%s682 + $0x1c] sm:$0xf]
        %v691 = vld [vmem:[%s682 + $0x20] sm:$0xf]
        %v692 = vld [vmem:[%s682 + $0x24] sm:$0xf]
        %v693 = vld [vmem:[%s682 + $0x28] sm:$0xf]
        %v694 = vld [vmem:[%s682 + $0x2c] sm:$0xf]
        %v695 = vld [vmem:[%s682 + $0x30] sm:$0xf]
        %v696 = vld [vmem:[%s682 + $0x34] sm:$0xf]
        %v697 = vld [vmem:[%s682 + $0x38] sm:$0xf]
        %v698 = vld [vmem:[%s682 + $0x3c] sm:$0xf]
        %s699 = scalar_lea.vmem [#allocation8], 2
        %v700 = vld [vmem:[%s699] sm:$0x1]
        %v702 = vlaneseq
        %v703 = vshrl.u32 %v702, 7
        %v704 = vsub.s32 0, %v703
        %v705 = vrot.slane %v700, %v704
        %v723 = vunpack.c.l.b16 %v683
        %v724 = vunpack.c.l.b16 %v684
        %v725 = vunpack.c.l.b16 %v685
        %v726 = vunpack.c.l.b16 %v686
        %v727 = vunpack.c.l.b16 %v687
        %v728 = vunpack.c.l.b16 %v688
        %v729 = vunpack.c.l.b16 %v689
        %v730 = vunpack.c.l.b16 %v690
        %v731 = vunpack.c.l.b16 %v691
        %v732 = vunpack.c.l.b16 %v692
        %v733 = vunpack.c.l.b16 %v693
        %v734 = vunpack.c.l.b16 %v694
        %v735 = vunpack.c.l.b16 %v695
        %v736 = vunpack.c.l.b16 %v696
        %v737 = vunpack.c.l.b16 %v697
        %v738 = vunpack.c.l.b16 %v698
        %v739 = vpack.c.b16 %v724, %v723
        %v740 = vpack.c.b16 %v726, %v725
        %v741 = vpack.c.b16 %v728, %v727
        %v742 = vpack.c.b16 %v730, %v729
        %v743 = vpack.c.b16 %v732, %v731
        %v744 = vpack.c.b16 %v734, %v733
        %v745 = vpack.c.b16 %v736, %v735
        %v746 = vpack.c.b16 %v738, %v737
        %755 = vmatprep.subr.bf16.mxu0 0
        %756 = vmatpush1.bf16.msra.mxu0 %v746
        %757 = vmatprep.subr.bf16.mxu0 0
        %758 = vmatpush1.bf16.msra.mxu0 %v745
        %759 = vmatprep.subr.bf16.mxu0 0
        %760 = vmatpush1.bf16.msra.mxu0 %v744
        %761 = vmatprep.subr.bf16.mxu0 0
        %762 = vmatpush1.bf16.msra.mxu0 %v743
        %763 = vmatprep.subr.bf16.mxu0 0
        %764 = vmatpush1.bf16.msra.mxu0 %v742
        %765 = vmatprep.subr.bf16.mxu0 0
        %766 = vmatpush1.bf16.msra.mxu0 %v741
        %767 = vmatprep.subr.bf16.mxu0 0
        %768 = vmatpush1.bf16.msra.mxu0 %v740
        %769 = vmatprep.subr.bf16.mxu0 0
        %770 = vmatpush1.bf16.msra.mxu0 %v739
        %771 = vmatprep.subr.bf16.mxu0 0
        %772 = vmatpush2.bf16.msra.mxu0 0
        %773 = vmatprep.subr.bf16.mxu0 0
        %774 = vmatpush2.bf16.msra.mxu0 0
        %775 = vmatprep.subr.bf16.mxu0 0
        %776 = vmatpush2.bf16.msra.mxu0 0
        %777 = vmatprep.subr.bf16.mxu0 0
        %778 = vmatpush2.bf16.msra.mxu0 0
        %779 = vmatprep.subr.bf16.mxu0 0
        %780 = vmatpush2.bf16.msra.mxu0 0
        %781 = vmatprep.subr.bf16.mxu0 0
        %782 = vmatpush2.bf16.msra.mxu0 0
        %783 = vmatprep.subr.bf16.mxu0 0
        %784 = vmatpush2.bf16.msra.mxu0 0
        %785 = vmatprep.subr.bf16.mxu0 0
        %786 = vmatpush2.bf16.msra.mxu0 0
        %787 = vmatprep.mubr.bf16.mxu0 0
        %788 = vmatmul.mubr.bf16.gmra.mxu0 %v675
        %v789 = vpop.f32.mrf.mxu0
        %v790 = vadd.f32 %v705, %v789
        %v791 = vpop.f32.mrf.mxu0
        %v792 = vpop.f32.mrf.mxu0
        %v793 = vadd.f32 %v705, %v792
        %v794 = vpop.f32.mrf.mxu0
        %795 = vmatprep.mubr.bf16.mxu0 0
        %796 = vmatmul.mubr.bf16.gmra.mxu0 %v676
        %v797 = vpop.f32.mrf.mxu0
        %v798 = vadd.f32 %v705, %v797
        %v799 = vpop.f32.mrf.mxu0
        %v800 = vpop.f32.mrf.mxu0
        %v801 = vadd.f32 %v705, %v800
        %v802 = vpop.f32.mrf.mxu0
        %803 = vmatprep.mubr.bf16.mxu0 0
        %804 = vmatmul.mubr.bf16.gmra.mxu0 %v677
        %v805 = vpop.f32.mrf.mxu0
        %v806 = vadd.f32 %v705, %v805
        %v807 = vpop.f32.mrf.mxu0
        %v808 = vpop.f32.mrf.mxu0
        %v809 = vadd.f32 %v705, %v808
        %v810 = vpop.f32.mrf.mxu0
        %811 = vmatprep.mubr.bf16.mxu0 0
        %812 = vmatmul.mubr.bf16.gmra.mxu0 %v678
        %v813 = vpop.f32.mrf.mxu0
        %v814 = vadd.f32 %v705, %v813
        %v815 = vpop.f32.mrf.mxu0
        %v816 = vpop.f32.mrf.mxu0
        %v817 = vadd.f32 %v705, %v816
        %v818 = vpop.f32.mrf.mxu0
        %819 = vmatprep.mubr.bf16.mxu0 0
        %820 = vmatmul.mubr.bf16.gmra.mxu0 %v679
        %v821 = vpop.f32.mrf.mxu0
        %v822 = vadd.f32 %v705, %v821
        %v823 = vpop.f32.mrf.mxu0
        %v824 = vpop.f32.mrf.mxu0
        %v825 = vadd.f32 %v705, %v824
        %v826 = vpop.f32.mrf.mxu0
        %827 = vmatprep.mubr.bf16.mxu0 0
        %828 = vmatmul.mubr.bf16.gmra.mxu0 %v680
        %v829 = vpop.f32.mrf.mxu0
        %v830 = vadd.f32 %v705, %v829
        %v831 = vpop.f32.mrf.mxu0
        %v832 = vpop.f32.mrf.mxu0
        %v833 = vadd.f32 %v705, %v832
        %v834 = vpop.f32.mrf.mxu0
        %835 = vmatprep.mubr.bf16.mxu0 0
        %836 = vmatmul.mubr.bf16.gmra.mxu0 %v681
        %v837 = vpop.f32.mrf.mxu0
        %v838 = vadd.f32 %v705, %v837
        %v839 = vpop.f32.mrf.mxu0
        %v840 = vpop.f32.mrf.mxu0
        %v841 = vadd.f32 %v705, %v840
        %v842 = vpop.f32.mrf.mxu0
        %843 = vdwg.mxu0
        %v844 = vmax.f32 %v790, 0.0
        %v845 = vmax.f32 %v793, 0.0
        %v846 = vmax.f32 %v798, 0.0
        %v847 = vmax.f32 %v801, 0.0
        %v848 = vmax.f32 %v806, 0.0
        %v849 = vmax.f32 %v809, 0.0
        %v850 = vmax.f32 %v814, 0.0
        %v851 = vmax.f32 %v817, 0.0
        %v852 = vmax.f32 %v822, 0.0
        %v853 = vmax.f32 %v825, 0.0
        %v854 = vmax.f32 %v830, 0.0
        %v855 = vmax.f32 %v833, 0.0
        %v856 = vmax.f32 %v838, 0.0
        %v857 = vmax.f32 %v841, 0.0
        %v858 = vpack.c.bf16 %v845, %v844
        %v859 = vpack.c.bf16 %v847, %v846
        %v860 = vpack.c.bf16 %v849, %v848
        %v861 = vpack.c.bf16 %v851, %v850
        %v862 = vpack.c.bf16 %v853, %v852
        %v863 = vpack.c.bf16 %v855, %v854
        %v864 = vpack.c.bf16 %v857, %v856
        %s865 = scalar_lea.vmem [#allocation7], 128
        %v866 = vld [vmem:[%s865] sm:$0xf]
        %v867 = vld [vmem:[%s865 + $0x4] sm:$0xf]
        %v868 = vld [vmem:[%s865 + $0x8] sm:$0xf]
        %v869 = vld [vmem:[%s865 + $0xc] sm:$0xf]
        %v870 = vld [vmem:[%s865 + $0x10] sm:$0xf]
        %v871 = vld [vmem:[%s865 + $0x14] sm:$0xf]
        %v872 = vld [vmem:[%s865 + $0x18] sm:$0xf]
        %v873 = vld [vmem:[%s865 + $0x1c] sm:$0xf]
        %v874 = vld [vmem:[%s865 + $0x20] sm:$0xf]
        %v875 = vld [vmem:[%s865 + $0x24] sm:$0xf]
        %v876 = vld [vmem:[%s865 + $0x28] sm:$0xf]
        %v877 = vld [vmem:[%s865 + $0x2c] sm:$0xf]
        %v878 = vld [vmem:[%s865 + $0x30] sm:$0xf]
        %v879 = vld [vmem:[%s865 + $0x34] sm:$0xf]
        %v880 = vld [vmem:[%s865 + $0x38] sm:$0xf]
        %v881 = vld [vmem:[%s865 + $0x3c] sm:$0xf]
        %s882 = scalar_lea.vmem [#allocation8], 3
        %v883 = vld [vmem:[%s882] sm:$0x1]
        %v885 = vlaneseq
        %v886 = vshrl.u32 %v885, 7
        %v887 = vsub.s32 0, %v886
        %v888 = vrot.slane %v883, %v887
        %v906 = vunpack.c.l.b16 %v866
        %v907 = vunpack.c.l.b16 %v867
        %v908 = vunpack.c.l.b16 %v868
        %v909 = vunpack.c.l.b16 %v869
        %v910 = vunpack.c.l.b16 %v870
        %v911 = vunpack.c.l.b16 %v871
        %v912 = vunpack.c.l.b16 %v872
        %v913 = vunpack.c.l.b16 %v873
        %v914 = vunpack.c.l.b16 %v874
        %v915 = vunpack.c.l.b16 %v875
        %v916 = vunpack.c.l.b16 %v876
        %v917 = vunpack.c.l.b16 %v877
        %v918 = vunpack.c.l.b16 %v878
        %v919 = vunpack.c.l.b16 %v879
        %v920 = vunpack.c.l.b16 %v880
        %v921 = vunpack.c.l.b16 %v881
        %v922 = vpack.c.b16 %v907, %v906
        %v923 = vpack.c.b16 %v909, %v908
        %v924 = vpack.c.b16 %v911, %v910
        %v925 = vpack.c.b16 %v913, %v912
        %v926 = vpack.c.b16 %v915, %v914
        %v927 = vpack.c.b16 %v917, %v916
        %v928 = vpack.c.b16 %v919, %v918
        %v929 = vpack.c.b16 %v921, %v920
        %938 = vmatprep.subr.bf16.mxu0 0
        %939 = vmatpush1.bf16.msra.mxu0 %v929
        %940 = vmatprep.subr.bf16.mxu0 0
        %941 = vmatpush1.bf16.msra.mxu0 %v928
        %942 = vmatprep.subr.bf16.mxu0 0
        %943 = vmatpush1.bf16.msra.mxu0 %v927
        %944 = vmatprep.subr.bf16.mxu0 0
        %945 = vmatpush1.bf16.msra.mxu0 %v926
        %946 = vmatprep.subr.bf16.mxu0 0
        %947 = vmatpush1.bf16.msra.mxu0 %v925
        %948 = vmatprep.subr.bf16.mxu0 0
        %949 = vmatpush1.bf16.msra.mxu0 %v924
        %950 = vmatprep.subr.bf16.mxu0 0
        %951 = vmatpush1.bf16.msra.mxu0 %v923
        %952 = vmatprep.subr.bf16.mxu0 0
        %953 = vmatpush1.bf16.msra.mxu0 %v922
        %954 = vmatprep.subr.bf16.mxu0 0
        %955 = vmatpush2.bf16.msra.mxu0 0
        %956 = vmatprep.subr.bf16.mxu0 0
        %957 = vmatpush2.bf16.msra.mxu0 0
        %958 = vmatprep.subr.bf16.mxu0 0
        %959 = vmatpush2.bf16.msra.mxu0 0
        %960 = vmatprep.subr.bf16.mxu0 0
        %961 = vmatpush2.bf16.msra.mxu0 0
        %962 = vmatprep.subr.bf16.mxu0 0
        %963 = vmatpush2.bf16.msra.mxu0 0
        %964 = vmatprep.subr.bf16.mxu0 0
        %965 = vmatpush2.bf16.msra.mxu0 0
        %966 = vmatprep.subr.bf16.mxu0 0
        %967 = vmatpush2.bf16.msra.mxu0 0
        %968 = vmatprep.subr.bf16.mxu0 0
        %969 = vmatpush2.bf16.msra.mxu0 0
        %970 = vmatprep.mubr.bf16.mxu0 0
        %971 = vmatmul.mubr.bf16.gmra.mxu0 %v858
        %v972 = vpop.f32.mrf.mxu0
        %v973 = vadd.f32 %v888, %v972
        %v974 = vpop.f32.mrf.mxu0
        %v975 = vpop.f32.mrf.mxu0
        %v976 = vadd.f32 %v888, %v975
        %v977 = vpop.f32.mrf.mxu0
        %978 = vmatprep.mubr.bf16.mxu0 0
        %979 = vmatmul.mubr.bf16.gmra.mxu0 %v859
        %v980 = vpop.f32.mrf.mxu0
        %v981 = vadd.f32 %v888, %v980
        %v982 = vpop.f32.mrf.mxu0
        %v983 = vpop.f32.mrf.mxu0
        %v984 = vadd.f32 %v888, %v983
        %v985 = vpop.f32.mrf.mxu0
        %986 = vmatprep.mubr.bf16.mxu0 0
        %987 = vmatmul.mubr.bf16.gmra.mxu0 %v860
        %v988 = vpop.f32.mrf.mxu0
        %v989 = vadd.f32 %v888, %v988
        %v990 = vpop.f32.mrf.mxu0
        %v991 = vpop.f32.mrf.mxu0
        %v992 = vadd.f32 %v888, %v991
        %v993 = vpop.f32.mrf.mxu0
        %994 = vmatprep.mubr.bf16.mxu0 0
        %995 = vmatmul.mubr.bf16.gmra.mxu0 %v861
        %v996 = vpop.f32.mrf.mxu0
        %v997 = vadd.f32 %v888, %v996
        %v998 = vpop.f32.mrf.mxu0
        %v999 = vpop.f32.mrf.mxu0
        %v1000 = vadd.f32 %v888, %v999
        %v1001 = vpop.f32.mrf.mxu0
        %1002 = vmatprep.mubr.bf16.mxu0 0
        %1003 = vmatmul.mubr.bf16.gmra.mxu0 %v862
        %v1004 = vpop.f32.mrf.mxu0
        %v1005 = vadd.f32 %v888, %v1004
        %v1006 = vpop.f32.mrf.mxu0
        %v1007 = vpop.f32.mrf.mxu0
        %v1008 = vadd.f32 %v888, %v1007
        %v1009 = vpop.f32.mrf.mxu0
        %1010 = vmatprep.mubr.bf16.mxu0 0
        %1011 = vmatmul.mubr.bf16.gmra.mxu0 %v863
        %v1012 = vpop.f32.mrf.mxu0
        %v1013 = vadd.f32 %v888, %v1012
        %v1014 = vpop.f32.mrf.mxu0
        %v1015 = vpop.f32.mrf.mxu0
        %v1016 = vadd.f32 %v888, %v1015
        %v1017 = vpop.f32.mrf.mxu0
        %1018 = vmatprep.mubr.bf16.mxu0 0
        %1019 = vmatmul.mubr.bf16.gmra.mxu0 %v864
        %v1020 = vpop.f32.mrf.mxu0
        %v1021 = vadd.f32 %v888, %v1020
        %v1022 = vpop.f32.mrf.mxu0
        %v1023 = vpop.f32.mrf.mxu0
        %v1024 = vadd.f32 %v888, %v1023
        %v1025 = vpop.f32.mrf.mxu0
        %1026 = vdwg.mxu0
        %v1027 = vmax.f32 %v973, 0.0
        %v1028 = vmax.f32 %v976, 0.0
        %v1029 = vmax.f32 %v981, 0.0
        %v1030 = vmax.f32 %v984, 0.0
        %v1031 = vmax.f32 %v989, 0.0
        %v1032 = vmax.f32 %v992, 0.0
        %v1033 = vmax.f32 %v997, 0.0
        %v1034 = vmax.f32 %v1000, 0.0
        %v1035 = vmax.f32 %v1005, 0.0
        %v1036 = vmax.f32 %v1008, 0.0
        %v1037 = vmax.f32 %v1013, 0.0
        %v1038 = vmax.f32 %v1016, 0.0
        %v1039 = vmax.f32 %v1021, 0.0
        %v1040 = vmax.f32 %v1024, 0.0
        %v1041 = vpack.c.bf16 %v1028, %v1027
        %v1042 = vpack.c.bf16 %v1030, %v1029
        %v1043 = vpack.c.bf16 %v1032, %v1031
        %v1044 = vpack.c.bf16 %v1034, %v1033
        %v1045 = vpack.c.bf16 %v1036, %v1035
        %v1046 = vpack.c.bf16 %v1038, %v1037
        %v1047 = vpack.c.bf16 %v1040, %v1039
        %s1048 = scalar_lea.vmem [#allocation7], 192
        %v1049 = vld [vmem:[%s1048] sm:$0xf]
        %v1050 = vld [vmem:[%s1048 + $0x4] sm:$0xf]
        %v1051 = vld [vmem:[%s1048 + $0x8] sm:$0xf]
        %v1052 = vld [vmem:[%s1048 + $0xc] sm:$0xf]
        %v1053 = vld [vmem:[%s1048 + $0x10] sm:$0xf]
        %v1054 = vld [vmem:[%s1048 + $0x14] sm:$0xf]
        %v1055 = vld [vmem:[%s1048 + $0x18] sm:$0xf]
        %v1056 = vld [vmem:[%s1048 + $0x1c] sm:$0xf]
        %v1057 = vld [vmem:[%s1048 + $0x20] sm:$0xf]
        %v1058 = vld [vmem:[%s1048 + $0x24] sm:$0xf]
        %v1059 = vld [vmem:[%s1048 + $0x28] sm:$0xf]
        %v1060 = vld [vmem:[%s1048 + $0x2c] sm:$0xf]
        %v1061 = vld [vmem:[%s1048 + $0x30] sm:$0xf]
        %v1062 = vld [vmem:[%s1048 + $0x34] sm:$0xf]
        %v1063 = vld [vmem:[%s1048 + $0x38] sm:$0xf]
        %v1064 = vld [vmem:[%s1048 + $0x3c] sm:$0xf]
        %s1065 = scalar_lea.vmem [#allocation8], 4
        %v1066 = vld [vmem:[%s1065] sm:$0x1]
        %v1068 = vlaneseq
        %v1069 = vshrl.u32 %v1068, 7
        %v1070 = vsub.s32 0, %v1069
        %v1071 = vrot.slane %v1066, %v1070
        %v1089 = vunpack.c.l.b16 %v1049
        %v1090 = vunpack.c.l.b16 %v1050
        %v1091 = vunpack.c.l.b16 %v1051
        %v1092 = vunpack.c.l.b16 %v1052
        %v1093 = vunpack.c.l.b16 %v1053
        %v1094 = vunpack.c.l.b16 %v1054
        %v1095 = vunpack.c.l.b16 %v1055
        %v1096 = vunpack.c.l.b16 %v1056
        %v1097 = vunpack.c.l.b16 %v1057
        %v1098 = vunpack.c.l.b16 %v1058
        %v1099 = vunpack.c.l.b16 %v1059
        %v1100 = vunpack.c.l.b16 %v1060
        %v1101 = vunpack.c.l.b16 %v1061
        %v1102 = vunpack.c.l.b16 %v1062
        %v1103 = vunpack.c.l.b16 %v1063
        %v1104 = vunpack.c.l.b16 %v1064
        %v1105 = vpack.c.b16 %v1090, %v1089
        %v1106 = vpack.c.b16 %v1092, %v1091
        %v1107 = vpack.c.b16 %v1094, %v1093
        %v1108 = vpack.c.b16 %v1096, %v1095
        %v1109 = vpack.c.b16 %v1098, %v1097
        %v1110 = vpack.c.b16 %v1100, %v1099
        %v1111 = vpack.c.b16 %v1102, %v1101
        %v1112 = vpack.c.b16 %v1104, %v1103
        %1121 = vmatprep.subr.bf16.mxu0 0
        %1122 = vmatpush1.bf16.msra.mxu0 %v1112
        %1123 = vmatprep.subr.bf16.mxu0 0
        %1124 = vmatpush1.bf16.msra.mxu0 %v1111
        %1125 = vmatprep.subr.bf16.mxu0 0
        %1126 = vmatpush1.bf16.msra.mxu0 %v1110
        %1127 = vmatprep.subr.bf16.mxu0 0
        %1128 = vmatpush1.bf16.msra.mxu0 %v1109
        %1129 = vmatprep.subr.bf16.mxu0 0
        %1130 = vmatpush1.bf16.msra.mxu0 %v1108
        %1131 = vmatprep.subr.bf16.mxu0 0
        %1132 = vmatpush1.bf16.msra.mxu0 %v1107
        %1133 = vmatprep.subr.bf16.mxu0 0
        %1134 = vmatpush1.bf16.msra.mxu0 %v1106
        %1135 = vmatprep.subr.bf16.mxu0 0
        %1136 = vmatpush1.bf16.msra.mxu0 %v1105
        %1137 = vmatprep.subr.bf16.mxu0 0
        %1138 = vmatpush2.bf16.msra.mxu0 0
        %1139 = vmatprep.subr.bf16.mxu0 0
        %1140 = vmatpush2.bf16.msra.mxu0 0
        %1141 = vmatprep.subr.bf16.mxu0 0
        %1142 = vmatpush2.bf16.msra.mxu0 0
        %1143 = vmatprep.subr.bf16.mxu0 0
        %1144 = vmatpush2.bf16.msra.mxu0 0
        %1145 = vmatprep.subr.bf16.mxu0 0
        %1146 = vmatpush2.bf16.msra.mxu0 0
        %1147 = vmatprep.subr.bf16.mxu0 0
        %1148 = vmatpush2.bf16.msra.mxu0 0
        %1149 = vmatprep.subr.bf16.mxu0 0
        %1150 = vmatpush2.bf16.msra.mxu0 0
        %1151 = vmatprep.subr.bf16.mxu0 0
        %1152 = vmatpush2.bf16.msra.mxu0 0
        %1153 = vmatprep.mubr.bf16.mxu0 0
        %1154 = vmatmul.mubr.bf16.gmra.mxu0 %v1041
        %v1155 = vpop.f32.mrf.mxu0
        %v1156 = vadd.f32 %v1071, %v1155
        %v1157 = vpop.f32.mrf.mxu0
        %v1158 = vpop.f32.mrf.mxu0
        %v1159 = vadd.f32 %v1071, %v1158
        %v1160 = vpop.f32.mrf.mxu0
        %1161 = vmatprep.mubr.bf16.mxu0 0
        %1162 = vmatmul.mubr.bf16.gmra.mxu0 %v1042
        %v1163 = vpop.f32.mrf.mxu0
        %v1164 = vadd.f32 %v1071, %v1163
        %v1165 = vpop.f32.mrf.mxu0
        %v1166 = vpop.f32.mrf.mxu0
        %v1167 = vadd.f32 %v1071, %v1166
        %v1168 = vpop.f32.mrf.mxu0
        %1169 = vmatprep.mubr.bf16.mxu0 0
        %1170 = vmatmul.mubr.bf16.gmra.mxu0 %v1043
        %v1171 = vpop.f32.mrf.mxu0
        %v1172 = vadd.f32 %v1071, %v1171
        %v1173 = vpop.f32.mrf.mxu0
        %v1174 = vpop.f32.mrf.mxu0
        %v1175 = vadd.f32 %v1071, %v1174
        %v1176 = vpop.f32.mrf.mxu0
        %1177 = vmatprep.mubr.bf16.mxu0 0
        %1178 = vmatmul.mubr.bf16.gmra.mxu0 %v1044
        %v1179 = vpop.f32.mrf.mxu0
        %v1180 = vadd.f32 %v1071, %v1179
        %v1181 = vpop.f32.mrf.mxu0
        %v1182 = vpop.f32.mrf.mxu0
        %v1183 = vadd.f32 %v1071, %v1182
        %v1184 = vpop.f32.mrf.mxu0
        %1185 = vmatprep.mubr.bf16.mxu0 0
        %1186 = vmatmul.mubr.bf16.gmra.mxu0 %v1045
        %v1187 = vpop.f32.mrf.mxu0
        %v1188 = vadd.f32 %v1071, %v1187
        %v1189 = vpop.f32.mrf.mxu0
        %v1190 = vpop.f32.mrf.mxu0
        %v1191 = vadd.f32 %v1071, %v1190
        %v1192 = vpop.f32.mrf.mxu0
        %1193 = vmatprep.mubr.bf16.mxu0 0
        %1194 = vmatmul.mubr.bf16.gmra.mxu0 %v1046
        %v1195 = vpop.f32.mrf.mxu0
        %v1196 = vadd.f32 %v1071, %v1195
        %v1197 = vpop.f32.mrf.mxu0
        %v1198 = vpop.f32.mrf.mxu0
        %v1199 = vadd.f32 %v1071, %v1198
        %v1200 = vpop.f32.mrf.mxu0
        %1201 = vmatprep.mubr.bf16.mxu0 0
        %1202 = vmatmul.mubr.bf16.gmra.mxu0 %v1047
        %v1203 = vpop.f32.mrf.mxu0
        %v1204 = vadd.f32 %v1071, %v1203
        %v1205 = vpop.f32.mrf.mxu0
        %v1206 = vpop.f32.mrf.mxu0
        %v1207 = vadd.f32 %v1071, %v1206
        %v1208 = vpop.f32.mrf.mxu0
        %1209 = vdwg.mxu0
        %v1210 = vmax.f32 %v1156, 0.0
        %v1211 = vmax.f32 %v1159, 0.0
        %v1212 = vmax.f32 %v1164, 0.0
        %v1213 = vmax.f32 %v1167, 0.0
        %v1214 = vmax.f32 %v1172, 0.0
        %v1215 = vmax.f32 %v1175, 0.0
        %v1216 = vmax.f32 %v1180, 0.0
        %v1217 = vmax.f32 %v1183, 0.0
        %v1218 = vmax.f32 %v1188, 0.0
        %v1219 = vmax.f32 %v1191, 0.0
        %v1220 = vmax.f32 %v1196, 0.0
        %v1221 = vmax.f32 %v1199, 0.0
        %v1222 = vmax.f32 %v1204, 0.0
        %v1223 = vmax.f32 %v1207, 0.0
        %v1224 = vpack.c.bf16 %v1211, %v1210
        %v1225 = vpack.c.bf16 %v1213, %v1212
        %v1226 = vpack.c.bf16 %v1215, %v1214
        %v1227 = vpack.c.bf16 %v1217, %v1216
        %v1228 = vpack.c.bf16 %v1219, %v1218
        %v1229 = vpack.c.bf16 %v1221, %v1220
        %v1230 = vpack.c.bf16 %v1223, %v1222
        %s1231 = scalar_lea.vmem [#allocation7], 256
        %v1232 = vld [vmem:[%s1231] sm:$0xf]
        %v1233 = vld [vmem:[%s1231 + $0x4] sm:$0xf]
        %v1234 = vld [vmem:[%s1231 + $0x8] sm:$0xf]
        %v1235 = vld [vmem:[%s1231 + $0xc] sm:$0xf]
        %v1236 = vld [vmem:[%s1231 + $0x10] sm:$0xf]
        %v1237 = vld [vmem:[%s1231 + $0x14] sm:$0xf]
        %v1238 = vld [vmem:[%s1231 + $0x18] sm:$0xf]
        %v1239 = vld [vmem:[%s1231 + $0x1c] sm:$0xf]
        %v1240 = vld [vmem:[%s1231 + $0x20] sm:$0xf]
        %v1241 = vld [vmem:[%s1231 + $0x24] sm:$0xf]
        %v1242 = vld [vmem:[%s1231 + $0x28] sm:$0xf]
        %v1243 = vld [vmem:[%s1231 + $0x2c] sm:$0xf]
        %v1244 = vld [vmem:[%s1231 + $0x30] sm:$0xf]
        %v1245 = vld [vmem:[%s1231 + $0x34] sm:$0xf]
        %v1246 = vld [vmem:[%s1231 + $0x38] sm:$0xf]
        %v1247 = vld [vmem:[%s1231 + $0x3c] sm:$0xf]
        %s1248 = scalar_lea.vmem [#allocation8], 5
        %v1249 = vld [vmem:[%s1248] sm:$0x1]
        %v1251 = vlaneseq
        %v1252 = vshrl.u32 %v1251, 7
        %v1253 = vsub.s32 0, %v1252
        %v1254 = vrot.slane %v1249, %v1253
        %v1272 = vunpack.c.l.b16 %v1232
        %v1273 = vunpack.c.l.b16 %v1233
        %v1274 = vunpack.c.l.b16 %v1234
        %v1275 = vunpack.c.l.b16 %v1235
        %v1276 = vunpack.c.l.b16 %v1236
        %v1277 = vunpack.c.l.b16 %v1237
        %v1278 = vunpack.c.l.b16 %v1238
        %v1279 = vunpack.c.l.b16 %v1239
        %v1280 = vunpack.c.l.b16 %v1240
        %v1281 = vunpack.c.l.b16 %v1241
        %v1282 = vunpack.c.l.b16 %v1242
        %v1283 = vunpack.c.l.b16 %v1243
        %v1284 = vunpack.c.l.b16 %v1244
        %v1285 = vunpack.c.l.b16 %v1245
        %v1286 = vunpack.c.l.b16 %v1246
        %v1287 = vunpack.c.l.b16 %v1247
        %v1288 = vpack.c.b16 %v1273, %v1272
        %v1289 = vpack.c.b16 %v1275, %v1274
        %v1290 = vpack.c.b16 %v1277, %v1276
        %v1291 = vpack.c.b16 %v1279, %v1278
        %v1292 = vpack.c.b16 %v1281, %v1280
        %v1293 = vpack.c.b16 %v1283, %v1282
        %v1294 = vpack.c.b16 %v1285, %v1284
        %v1295 = vpack.c.b16 %v1287, %v1286
        %1304 = vmatprep.subr.bf16.mxu0 0
        %1305 = vmatpush1.bf16.msra.mxu0 %v1295
        %1306 = vmatprep.subr.bf16.mxu0 0
        %1307 = vmatpush1.bf16.msra.mxu0 %v1294
        %1308 = vmatprep.subr.bf16.mxu0 0
        %1309 = vmatpush1.bf16.msra.mxu0 %v1293
        %1310 = vmatprep.subr.bf16.mxu0 0
        %1311 = vmatpush1.bf16.msra.mxu0 %v1292
        %1312 = vmatprep.subr.bf16.mxu0 0
        %1313 = vmatpush1.bf16.msra.mxu0 %v1291
        %1314 = vmatprep.subr.bf16.mxu0 0
        %1315 = vmatpush1.bf16.msra.mxu0 %v1290
        %1316 = vmatprep.subr.bf16.mxu0 0
        %1317 = vmatpush1.bf16.msra.mxu0 %v1289
        %1318 = vmatprep.subr.bf16.mxu0 0
        %1319 = vmatpush1.bf16.msra.mxu0 %v1288
        %1320 = vmatprep.subr.bf16.mxu0 0
        %1321 = vmatpush2.bf16.msra.mxu0 0
        %1322 = vmatprep.subr.bf16.mxu0 0
        %1323 = vmatpush2.bf16.msra.mxu0 0
        %1324 = vmatprep.subr.bf16.mxu0 0
        %1325 = vmatpush2.bf16.msra.mxu0 0
        %1326 = vmatprep.subr.bf16.mxu0 0
        %1327 = vmatpush2.bf16.msra.mxu0 0
        %1328 = vmatprep.subr.bf16.mxu0 0
        %1329 = vmatpush2.bf16.msra.mxu0 0
        %1330 = vmatprep.subr.bf16.mxu0 0
        %1331 = vmatpush2.bf16.msra.mxu0 0
        %1332 = vmatprep.subr.bf16.mxu0 0
        %1333 = vmatpush2.bf16.msra.mxu0 0
        %1334 = vmatprep.subr.bf16.mxu0 0
        %1335 = vmatpush2.bf16.msra.mxu0 0
        %1336 = vmatprep.mubr.bf16.mxu0 0
        %1337 = vmatmul.mubr.bf16.gmra.mxu0 %v1224
        %v1338 = vpop.f32.mrf.mxu0
        %v1339 = vadd.f32 %v1254, %v1338
        %v1340 = vpop.f32.mrf.mxu0
        %v1341 = vpop.f32.mrf.mxu0
        %v1342 = vadd.f32 %v1254, %v1341
        %v1343 = vpop.f32.mrf.mxu0
        %1344 = vmatprep.mubr.bf16.mxu0 0
        %1345 = vmatmul.mubr.bf16.gmra.mxu0 %v1225
        %v1346 = vpop.f32.mrf.mxu0
        %v1347 = vadd.f32 %v1254, %v1346
        %v1348 = vpop.f32.mrf.mxu0
        %v1349 = vpop.f32.mrf.mxu0
        %v1350 = vadd.f32 %v1254, %v1349
        %v1351 = vpop.f32.mrf.mxu0
        %1352 = vmatprep.mubr.bf16.mxu0 0
        %1353 = vmatmul.mubr.bf16.gmra.mxu0 %v1226
        %v1354 = vpop.f32.mrf.mxu0
        %v1355 = vadd.f32 %v1254, %v1354
        %v1356 = vpop.f32.mrf.mxu0
        %v1357 = vpop.f32.mrf.mxu0
        %v1358 = vadd.f32 %v1254, %v1357
        %v1359 = vpop.f32.mrf.mxu0
        %1360 = vmatprep.mubr.bf16.mxu0 0
        %1361 = vmatmul.mubr.bf16.gmra.mxu0 %v1227
        %v1362 = vpop.f32.mrf.mxu0
        %v1363 = vadd.f32 %v1254, %v1362
        %v1364 = vpop.f32.mrf.mxu0
        %v1365 = vpop.f32.mrf.mxu0
        %v1366 = vadd.f32 %v1254, %v1365
        %v1367 = vpop.f32.mrf.mxu0
        %1368 = vmatprep.mubr.bf16.mxu0 0
        %1369 = vmatmul.mubr.bf16.gmra.mxu0 %v1228
        %v1370 = vpop.f32.mrf.mxu0
        %v1371 = vadd.f32 %v1254, %v1370
        %v1372 = vpop.f32.mrf.mxu0
        %v1373 = vpop.f32.mrf.mxu0
        %v1374 = vadd.f32 %v1254, %v1373
        %v1375 = vpop.f32.mrf.mxu0
        %1376 = vmatprep.mubr.bf16.mxu0 0
        %1377 = vmatmul.mubr.bf16.gmra.mxu0 %v1229
        %v1378 = vpop.f32.mrf.mxu0
        %v1379 = vadd.f32 %v1254, %v1378
        %v1380 = vpop.f32.mrf.mxu0
        %v1381 = vpop.f32.mrf.mxu0
        %v1382 = vadd.f32 %v1254, %v1381
        %v1383 = vpop.f32.mrf.mxu0
        %1384 = vmatprep.mubr.bf16.mxu0 0
        %1385 = vmatmul.mubr.bf16.gmra.mxu0 %v1230
        %v1386 = vpop.f32.mrf.mxu0
        %v1387 = vadd.f32 %v1254, %v1386
        %v1388 = vpop.f32.mrf.mxu0
        %v1389 = vpop.f32.mrf.mxu0
        %v1390 = vadd.f32 %v1254, %v1389
        %v1391 = vpop.f32.mrf.mxu0
        %1392 = vdwg.mxu0
        %v1393 = vmax.f32 %v1339, 0.0
        %v1394 = vmax.f32 %v1342, 0.0
        %v1395 = vmax.f32 %v1347, 0.0
        %v1396 = vmax.f32 %v1350, 0.0
        %v1397 = vmax.f32 %v1355, 0.0
        %v1398 = vmax.f32 %v1358, 0.0
        %v1399 = vmax.f32 %v1363, 0.0
        %v1400 = vmax.f32 %v1366, 0.0
        %v1401 = vmax.f32 %v1371, 0.0
        %v1402 = vmax.f32 %v1374, 0.0
        %v1403 = vmax.f32 %v1379, 0.0
        %v1404 = vmax.f32 %v1382, 0.0
        %v1405 = vmax.f32 %v1387, 0.0
        %v1406 = vmax.f32 %v1390, 0.0
        %v1407 = vpack.c.bf16 %v1394, %v1393
        %v1408 = vpack.c.bf16 %v1396, %v1395
        %v1409 = vpack.c.bf16 %v1398, %v1397
        %v1410 = vpack.c.bf16 %v1400, %v1399
        %v1411 = vpack.c.bf16 %v1402, %v1401
        %v1412 = vpack.c.bf16 %v1404, %v1403
        %v1413 = vpack.c.bf16 %v1406, %v1405
        %s1414 = scalar_lea.vmem [#allocation7], 320
        %v1415 = vld [vmem:[%s1414] sm:$0xf]
        %v1416 = vld [vmem:[%s1414 + $0x4] sm:$0xf]
        %v1417 = vld [vmem:[%s1414 + $0x8] sm:$0xf]
        %v1418 = vld [vmem:[%s1414 + $0xc] sm:$0xf]
        %v1419 = vld [vmem:[%s1414 + $0x10] sm:$0xf]
        %v1420 = vld [vmem:[%s1414 + $0x14] sm:$0xf]
        %v1421 = vld [vmem:[%s1414 + $0x18] sm:$0xf]
        %v1422 = vld [vmem:[%s1414 + $0x1c] sm:$0xf]
        %v1423 = vld [vmem:[%s1414 + $0x20] sm:$0xf]
        %v1424 = vld [vmem:[%s1414 + $0x24] sm:$0xf]
        %v1425 = vld [vmem:[%s1414 + $0x28] sm:$0xf]
        %v1426 = vld [vmem:[%s1414 + $0x2c] sm:$0xf]
        %v1427 = vld [vmem:[%s1414 + $0x30] sm:$0xf]
        %v1428 = vld [vmem:[%s1414 + $0x34] sm:$0xf]
        %v1429 = vld [vmem:[%s1414 + $0x38] sm:$0xf]
        %v1430 = vld [vmem:[%s1414 + $0x3c] sm:$0xf]
        %s1431 = scalar_lea.vmem [#allocation8], 6
        %v1432 = vld [vmem:[%s1431] sm:$0x1]
        %v1434 = vlaneseq
        %v1435 = vshrl.u32 %v1434, 7
        %v1436 = vsub.s32 0, %v1435
        %v1437 = vrot.slane %v1432, %v1436
        %v1455 = vunpack.c.l.b16 %v1415
        %v1456 = vunpack.c.l.b16 %v1416
        %v1457 = vunpack.c.l.b16 %v1417
        %v1458 = vunpack.c.l.b16 %v1418
        %v1459 = vunpack.c.l.b16 %v1419
        %v1460 = vunpack.c.l.b16 %v1420
        %v1461 = vunpack.c.l.b16 %v1421
        %v1462 = vunpack.c.l.b16 %v1422
        %v1463 = vunpack.c.l.b16 %v1423
        %v1464 = vunpack.c.l.b16 %v1424
        %v1465 = vunpack.c.l.b16 %v1425
        %v1466 = vunpack.c.l.b16 %v1426
        %v1467 = vunpack.c.l.b16 %v1427
        %v1468 = vunpack.c.l.b16 %v1428
        %v1469 = vunpack.c.l.b16 %v1429
        %v1470 = vunpack.c.l.b16 %v1430
        %v1471 = vpack.c.b16 %v1456, %v1455
        %v1472 = vpack.c.b16 %v1458, %v1457
        %v1473 = vpack.c.b16 %v1460, %v1459
        %v1474 = vpack.c.b16 %v1462, %v1461
        %v1475 = vpack.c.b16 %v1464, %v1463
        %v1476 = vpack.c.b16 %v1466, %v1465
        %v1477 = vpack.c.b16 %v1468, %v1467
        %v1478 = vpack.c.b16 %v1470, %v1469
        %1487 = vmatprep.subr.bf16.mxu0 0
        %1488 = vmatpush1.bf16.msra.mxu0 %v1478
        %1489 = vmatprep.subr.bf16.mxu0 0
        %1490 = vmatpush1.bf16.msra.mxu0 %v1477
        %1491 = vmatprep.subr.bf16.mxu0 0
        %1492 = vmatpush1.bf16.msra.mxu0 %v1476
        %1493 = vmatprep.subr.bf16.mxu0 0
        %1494 = vmatpush1.bf16.msra.mxu0 %v1475
        %1495 = vmatprep.subr.bf16.mxu0 0
        %1496 = vmatpush1.bf16.msra.mxu0 %v1474
        %1497 = vmatprep.subr.bf16.mxu0 0
        %1498 = vmatpush1.bf16.msra.mxu0 %v1473
        %1499 = vmatprep.subr.bf16.mxu0 0
        %1500 = vmatpush1.bf16.msra.mxu0 %v1472
        %1501 = vmatprep.subr.bf16.mxu0 0
        %1502 = vmatpush1.bf16.msra.mxu0 %v1471
        %1503 = vmatprep.subr.bf16.mxu0 0
        %1504 = vmatpush2.bf16.msra.mxu0 0
        %1505 = vmatprep.subr.bf16.mxu0 0
        %1506 = vmatpush2.bf16.msra.mxu0 0
        %1507 = vmatprep.subr.bf16.mxu0 0
        %1508 = vmatpush2.bf16.msra.mxu0 0
        %1509 = vmatprep.subr.bf16.mxu0 0
        %1510 = vmatpush2.bf16.msra.mxu0 0
        %1511 = vmatprep.subr.bf16.mxu0 0
        %1512 = vmatpush2.bf16.msra.mxu0 0
        %1513 = vmatprep.subr.bf16.mxu0 0
        %1514 = vmatpush2.bf16.msra.mxu0 0
        %1515 = vmatprep.subr.bf16.mxu0 0
        %1516 = vmatpush2.bf16.msra.mxu0 0
        %1517 = vmatprep.subr.bf16.mxu0 0
        %1518 = vmatpush2.bf16.msra.mxu0 0
        %1519 = vmatprep.mubr.bf16.mxu0 0
        %1520 = vmatmul.mubr.bf16.gmra.mxu0 %v1407
        %v1521 = vpop.f32.mrf.mxu0
        %v1522 = vadd.f32 %v1437, %v1521
        %v1523 = vpop.f32.mrf.mxu0
        %v1524 = vpop.f32.mrf.mxu0
        %v1525 = vadd.f32 %v1437, %v1524
        %v1526 = vpop.f32.mrf.mxu0
        %1527 = vmatprep.mubr.bf16.mxu0 0
        %1528 = vmatmul.mubr.bf16.gmra.mxu0 %v1408
        %v1529 = vpop.f32.mrf.mxu0
        %v1530 = vadd.f32 %v1437, %v1529
        %v1531 = vpop.f32.mrf.mxu0
        %v1532 = vpop.f32.mrf.mxu0
        %v1533 = vadd.f32 %v1437, %v1532
        %v1534 = vpop.f32.mrf.mxu0
        %1535 = vmatprep.mubr.bf16.mxu0 0
        %1536 = vmatmul.mubr.bf16.gmra.mxu0 %v1409
        %v1537 = vpop.f32.mrf.mxu0
        %v1538 = vadd.f32 %v1437, %v1537
        %v1539 = vpop.f32.mrf.mxu0
        %v1540 = vpop.f32.mrf.mxu0
        %v1541 = vadd.f32 %v1437, %v1540
        %v1542 = vpop.f32.mrf.mxu0
        %1543 = vmatprep.mubr.bf16.mxu0 0
        %1544 = vmatmul.mubr.bf16.gmra.mxu0 %v1410
        %v1545 = vpop.f32.mrf.mxu0
        %v1546 = vadd.f32 %v1437, %v1545
        %v1547 = vpop.f32.mrf.mxu0
        %v1548 = vpop.f32.mrf.mxu0
        %v1549 = vadd.f32 %v1437, %v1548
        %v1550 = vpop.f32.mrf.mxu0
        %1551 = vmatprep.mubr.bf16.mxu0 0
        %1552 = vmatmul.mubr.bf16.gmra.mxu0 %v1411
        %v1553 = vpop.f32.mrf.mxu0
        %v1554 = vadd.f32 %v1437, %v1553
        %v1555 = vpop.f32.mrf.mxu0
        %v1556 = vpop.f32.mrf.mxu0
        %v1557 = vadd.f32 %v1437, %v1556
        %v1558 = vpop.f32.mrf.mxu0
        %1559 = vmatprep.mubr.bf16.mxu0 0
        %1560 = vmatmul.mubr.bf16.gmra.mxu0 %v1412
        %v1561 = vpop.f32.mrf.mxu0
        %v1562 = vadd.f32 %v1437, %v1561
        %v1563 = vpop.f32.mrf.mxu0
        %v1564 = vpop.f32.mrf.mxu0
        %v1565 = vadd.f32 %v1437, %v1564
        %v1566 = vpop.f32.mrf.mxu0
        %1567 = vmatprep.mubr.bf16.mxu0 0
        %1568 = vmatmul.mubr.bf16.gmra.mxu0 %v1413
        %v1569 = vpop.f32.mrf.mxu0
        %v1570 = vadd.f32 %v1437, %v1569
        %v1571 = vpop.f32.mrf.mxu0
        %v1572 = vpop.f32.mrf.mxu0
        %v1573 = vadd.f32 %v1437, %v1572
        %v1574 = vpop.f32.mrf.mxu0
        %1575 = vdwg.mxu0
        %v1576 = vlaneseq
        %v1577 = vand.u32 %v1576, 127
        %vm1578 = vcmp.eq.s32.totalorder %v1577, 0
        %v1579 = vxor.u32 %v1522, 2147483648
        %v1580 = vxor.u32 %v1525, 2147483648
        %v1581 = vxor.u32 %v1530, 2147483648
        %v1582 = vxor.u32 %v1533, 2147483648
        %v1583 = vxor.u32 %v1538, 2147483648
        %v1584 = vxor.u32 %v1541, 2147483648
        %v1585 = vxor.u32 %v1546, 2147483648
        %v1586 = vxor.u32 %v1549, 2147483648
        %v1587 = vxor.u32 %v1554, 2147483648
        %v1588 = vxor.u32 %v1557, 2147483648
        %v1589 = vxor.u32 %v1562, 2147483648
        %v1590 = vxor.u32 %v1565, 2147483648
        %v1591 = vxor.u32 %v1570, 2147483648
        %v1592 = vxor.u32 %v1573, 2147483648
        %v1593 = vmul.f32 %v1579, 1.442695
        %v1594 = vpow.pop %v1593
        %v1595 = vmul.f32 %v1580, 1.442695
        %v1596 = vpow.pop %v1595
        %v1597 = vmul.f32 %v1581, 1.442695
        %v1598 = vpow.pop %v1597
        %v1599 = vmul.f32 %v1582, 1.442695
        %v1600 = vpow.pop %v1599
        %v1601 = vmul.f32 %v1583, 1.442695
        %v1602 = vpow.pop %v1601
        %v1603 = vmul.f32 %v1584, 1.442695
        %v1604 = vpow.pop %v1603
        %v1605 = vmul.f32 %v1585, 1.442695
        %v1606 = vpow.pop %v1605
        %v1607 = vmul.f32 %v1586, 1.442695
        %v1608 = vpow.pop %v1607
        %v1609 = vmul.f32 %v1587, 1.442695
        %v1610 = vpow.pop %v1609
        %v1611 = vmul.f32 %v1588, 1.442695
        %v1612 = vpow.pop %v1611
        %v1613 = vmul.f32 %v1589, 1.442695
        %v1614 = vpow.pop %v1613
        %v1615 = vmul.f32 %v1590, 1.442695
        %v1616 = vpow.pop %v1615
        %v1617 = vmul.f32 %v1591, 1.442695
        %v1618 = vpow.pop %v1617
        %v1619 = vmul.f32 %v1592, 1.442695
        %v1620 = vpow.pop %v1619
        %v1621 = vadd.f32 %v1594, 1.0
        %v1622 = vadd.f32 %v1596, 1.0
        %v1623 = vadd.f32 %v1598, 1.0
        %v1624 = vadd.f32 %v1600, 1.0
        %v1625 = vadd.f32 %v1602, 1.0
        %v1626 = vadd.f32 %v1604, 1.0
        %v1627 = vadd.f32 %v1606, 1.0
        %v1628 = vadd.f32 %v1608, 1.0
        %v1629 = vadd.f32 %v1610, 1.0
        %v1630 = vadd.f32 %v1612, 1.0
        %v1631 = vadd.f32 %v1614, 1.0
        %v1632 = vadd.f32 %v1616, 1.0
        %v1633 = vadd.f32 %v1618, 1.0
        %v1634 = vadd.f32 %v1620, 1.0
        %v1635 = vrcp.pop %v1621
        %v1636 = vmul.f32 1.0, %v1635
        %v1637 = vrcp.pop %v1622
        %v1638 = vmul.f32 1.0, %v1637
        %v1639 = vrcp.pop %v1623
        %v1640 = vmul.f32 1.0, %v1639
        %v1641 = vrcp.pop %v1624
        %v1642 = vmul.f32 1.0, %v1641
        %v1643 = vrcp.pop %v1625
        %v1644 = vmul.f32 1.0, %v1643
        %v1645 = vrcp.pop %v1626
        %v1646 = vmul.f32 1.0, %v1645
        %v1647 = vrcp.pop %v1627
        %v1648 = vmul.f32 1.0, %v1647
        %v1649 = vrcp.pop %v1628
        %v1650 = vmul.f32 1.0, %v1649
        %v1651 = vrcp.pop %v1629
        %v1652 = vmul.f32 1.0, %v1651
        %v1653 = vrcp.pop %v1630
        %v1654 = vmul.f32 1.0, %v1653
        %v1655 = vrcp.pop %v1631
        %v1656 = vmul.f32 1.0, %v1655
        %v1657 = vrcp.pop %v1632
        %v1658 = vmul.f32 1.0, %v1657
        %v1659 = vrcp.pop %v1633
        %v1660 = vmul.f32 1.0, %v1659
        %v1661 = vrcp.pop %v1634
        %v1662 = vmul.f32 1.0, %v1661
        %v1663 = vsel %vm1578, %v1522, %v1636
        %v1664 = vsel %vm1578, %v1525, %v1638
        %v1665 = vsel %vm1578, %v1530, %v1640
        %v1666 = vsel %vm1578, %v1533, %v1642
        %v1667 = vsel %vm1578, %v1538, %v1644
        %v1668 = vsel %vm1578, %v1541, %v1646
        %v1669 = vsel %vm1578, %v1546, %v1648
        %v1670 = vsel %vm1578, %v1549, %v1650
        %v1671 = vsel %vm1578, %v1554, %v1652
        %v1672 = vsel %vm1578, %v1557, %v1654
        %v1673 = vsel %vm1578, %v1562, %v1656
        %v1674 = vsel %vm1578, %v1565, %v1658
        %v1675 = vsel %vm1578, %v1570, %v1660
        %v1676 = vsel %vm1578, %v1573, %v1662
        %1677 = vst [vmem:[%s259] sm:$0xff] %v1663
        %1678 = vst [vmem:[%s259 + $0x8] sm:$0xff] %v1664
        %1679 = vst [vmem:[%s259 + $0x10] sm:$0xff] %v1665
        %1680 = vst [vmem:[%s259 + $0x18] sm:$0xff] %v1666
        %1681 = vst [vmem:[%s259 + $0x20] sm:$0xff] %v1667
        %1682 = vst [vmem:[%s259 + $0x28] sm:$0xff] %v1668
        %1683 = vst [vmem:[%s259 + $0x30] sm:$0xff] %v1669
        %1684 = vst [vmem:[%s259 + $0x38] sm:$0xff] %v1670
        %1685 = vst [vmem:[%s259 + $0x40] sm:$0xff] %v1671
        %1686 = vst [vmem:[%s259 + $0x48] sm:$0xff] %v1672
        %1687 = vst [vmem:[%s259 + $0x50] sm:$0xff] %v1673
        %1688 = vst [vmem:[%s259 + $0x58] sm:$0xff] %v1674
        %1689 = vst [vmem:[%s259 + $0x60] sm:$0xff] %v1675
        %1690 = vst [vmem:[%s259 + $0x68] sm:$0xff] %v1676
        %s1691 = sand.u32 %s120, 1
        %s1692 = scalar_lea.sflag [#allocation4], %s1691
        %s1693 = sand.u32 %s120, 1
        %s1694 = smul.addr %s1693, 112
        %s1695 = scalar_lea.vmem [#allocation10], %s1694
        // Predicated region
        $region53: #{tpu_custom_call.1} parent=35 // pred_check
          %p1696 = pneg %p130
        $region54: #{tpu_custom_call.1} parent=35 // pred_check_branch
          %1698 = sbr.rel (%p1696) target = $region56
        $region55: #{tpu_custom_call.1} parent=35 // pred_region
          %s1699 = smul.u32 14, %s23
          %s1701 = ssub.s32 1792, 1792
          %1702 = vsyncadd %s1692, %s1701
          %s1703 = smul.addr %s1699, 128
          %s1704 = scalar_lea.hbm %s4, %s1703
          %s1705 = sshll.u32 %s1695, 4
          %s1706 = int_to_ptr.vmem [resolvable:$true] %s1705
          %1711 = dma.vmem_to_hbm [thread:$0]  %s1706, 1792, %s1704, %s1692, 128, 128, 8
        $region56: #{tpu_custom_call.1} parent=35 // pred_fallthru
          _
      $region36: #{tpu_custom_call.1} parent=5 // pred_fallthru
        _
      %p1712 = scmp.le.s32.totalorder 2, %s18
      // Predicated region
      $region57: #{tpu_custom_call.1} parent=5 // pred_check
        %p1713 = pneg %p1712
      $region58: #{tpu_custom_call.1} parent=5 // pred_check_branch
        %1715 = sbr.rel (%p1713) target = $region60
      $region59: #{tpu_custom_call.1} parent=5 // pred_region
        %s1716 = ssub.s32 %s18, 2
        // Predicated region
        $region61: #{tpu_custom_call.1} parent=59 // pred_check
          %p1717 = pneg %p136
        $region62: #{tpu_custom_call.1} parent=59 // pred_check_branch
          %1719 = sbr.rel (%p1717) target = $region64
        $region63: #{tpu_custom_call.1} parent=59 // pred_region
          %s1720 = sand.u32 %s121, 1
          %s1721 = scalar_lea.sflag [#allocation4], %s1720
          %s1722 = sand.u32 %s121, 1
          %s1723 = smul.addr %s1722, 112
          %s1724 = scalar_lea.vmem [#allocation10], %s1723
          %1725 = dma.done %s1721, 1792
        $region64: #{tpu_custom_call.1} parent=59 // pred_fallthru
          _
      $region60: #{tpu_custom_call.1} parent=5 // pred_fallthru
        _
    $region6: #{tpu_custom_call.1} parent=1 // loop_footer
      %s22 = sadd.s32 1, %s18
    $region7: #{tpu_custom_call.1} parent=1 // loop_footer_branch
      %17 = sbr.rel target = $region3
    $region8: #{tpu_custom_call.1} parent=1 // loop_exit
      _
    %1726 = vsyncpa [#allocation3], 1
    %s1727 = scalar_lea.sflag [#allocation3], 1
    %1728 = vsyncpa %s1727, 1
    %1729 = vsyncpa [#allocation6], 1
    %1730 = vsyncpa [#allocation9], 1
    %1731 = vsyncpa [#allocation4], 1
    %s1732 = scalar_lea.sflag [#allocation4], 1
    %1733 = vsyncpa %s1732, 1

</llo_original>
